<compile_context>
chip_gen: v7x
topology: tpu7x:2x2x1
jax: 0.10.0
libtpu: 0.0.40
codegen_flags: <defaults>
</compile_context>

<pallas_src>
import functools
import math

import jax
import jax.numpy as jnp
from jax import lax
from jax.experimental import pallas as pl
from jax.experimental.pallas import tpu as pltpu


def _layernorm(x, gamma, beta, eps=1e-5):
    mu = jnp.mean(x, axis=-1, keepdims=True)
    var = jnp.mean((x - mu) ** 2, axis=-1, keepdims=True)
    return (x - mu) * lax.rsqrt(var + eps) * gamma + beta


def _gelu_exact(x):
    # nn.GELU() default: 0.5 * x * (1 + erf(x / sqrt(2)))
    return 0.5 * x * (1.0 + lax.erf(x * 0.7071067811865475))


def encoder_kernel(src_ref, wqkv_ref, bqkv_ref, wo_ref, bo_ref,
                   w1_ref, b1_ref, w2_ref, b2_ref,
                   g1_ref, be1_ref, g2_ref, be2_ref, out_ref, *, num_heads):
    Bt, L, E = src_ref.shape
    H = num_heads
    dh = E // H
    scale = 1.0 / math.sqrt(dh)

    # Row-batched activations: (Bt*L, E).  Merging the leading batch dim into
    # the sublane dim is a free reshape (L is a multiple of 8).
    x = src_ref[...].reshape(Bt * L, E)

    # Fused QKV projection: single (Bt*L, E) x (E, 3E) MXU contraction.
    qkv = jnp.dot(x, wqkv_ref[...], preferred_element_type=jnp.float32) + bqkv_ref[...]

    def split_heads(off):
        # (Bt*L, E) lane block at column offset `off` -> (H*Bt, L, dh).
        # Lane slices + leading-axis stack (XLU plumbing only); the two leading
        # reshape merges/splits are free.
        return jnp.stack(
            [qkv[:, off + h * dh: off + (h + 1) * dh].reshape(Bt, L, dh)
             for h in range(H)],
            axis=0,
        ).reshape(H * Bt, L, dh)

    q = split_heads(0) * scale          # (H*Bt, L, dh)
    k = split_heads(E)                  # (H*Bt, L, dh)
    v = split_heads(2 * E)              # (H*Bt, L, dh)

    # Single batched score / context contraction over heads AND batch elements.
    s = jnp.einsum('gld,gmd->glm', q, k,
                   preferred_element_type=jnp.float32)             # (H*Bt, L, L)
    s = s - jnp.max(s, axis=-1, keepdims=True)
    p = jnp.exp(s)
    p = p * pl.reciprocal(jnp.sum(p, axis=-1, keepdims=True), approx=True)
    ctx = jnp.einsum('glm,gmd->gld', p, v,
                     preferred_element_type=jnp.float32)            # (H*Bt, L, dh)

    # Merge heads back: (H*Bt, L, dh) -> (Bt*L, E).
    ctx = ctx.reshape(H, Bt, L, dh)
    ctx_all = jnp.concatenate(
        [ctx[h].reshape(Bt * L, dh) for h in range(H)], axis=-1)    # (Bt*L, E)

    attn = jnp.dot(ctx_all, wo_ref[...], preferred_element_type=jnp.float32) + bo_ref[...]

    # Residual + LayerNorm1
    h1 = _layernorm(x + attn, g1_ref[...], be1_ref[...])

    # Feed-forward: fc2(GELU(fc1(h1)))
    ff = jnp.dot(h1, w1_ref[...], preferred_element_type=jnp.float32) + b1_ref[...]
    ff = _gelu_exact(ff)
    ff = jnp.dot(ff, w2_ref[...], preferred_element_type=jnp.float32) + b2_ref[...]

    # Residual + LayerNorm2
    out_ref[...] = _layernorm(h1 + ff, g2_ref[...], be2_ref[...]).reshape(Bt, L, E)


def _pick_block_b(B, L):
    """Batch elements per grid step: grow the MXU M dim (target >=128 rows),
    but keep >= 2 parallel grid steps when B allows (v7x dual TensorCore)."""
    target = max(1, -(-128 // max(L, 1)))   # ceil(128 / L)
    best = 1
    for cand in range(1, B + 1):
        if B % cand == 0 and cand <= target and B // cand >= min(2, B):
            best = cand
    return best


def temporal_encoder_layer(src, params, num_heads, block_b=None):
    """src: (L, B, E) float32, like the PyTorch module. Returns (L, B, E)."""
    L, B, E = src.shape
    cm = params["w1"].shape[0]
    if block_b is None:
        block_b = _pick_block_b(B, L)
    assert B % block_b == 0

    # (L, B, E) -> (B, L, E): keeps every BlockSpec tile-aligned and makes the
    # in-kernel row flattening free (see header comment for the tradeoff).
    x = jnp.transpose(src, (1, 0, 2))

    wqkv = params["in_proj_w"].T                    # (E, 3E): columns = [q | k | v]
    bqkv = params["in_proj_b"].reshape(1, 3 * E)

    args = (
        x,
        wqkv, bqkv,
        params["out_w"].T, params["out_b"].reshape(1, E),
        params["w1"].T, params["b1"].reshape(1, cm),
        params["w2"].T, params["b2"].reshape(1, E),
        params["g1"].reshape(1, E), params["beta1"].reshape(1, E),
        params["g2"].reshape(1, E), params["beta2"].reshape(1, E),
    )

    def full_spec(a):
        nd = a.ndim
        return pl.BlockSpec(a.shape, lambda b, _nd=nd: (0,) * _nd)

    in_specs = ([pl.BlockSpec((block_b, L, E), lambda b: (b, 0, 0))]
                + [full_spec(a) for a in args[1:]])
    out_spec = pl.BlockSpec((block_b, L, E), lambda b: (b, 0, 0))

    out = pl.pallas_call(
        functools.partial(encoder_kernel, num_heads=num_heads),
        out_shape=jax.ShapeDtypeStruct((B, L, E), jnp.float32),
        grid=(B // block_b,),
        in_specs=in_specs,
        out_specs=out_spec,
        compiler_params=pltpu.CompilerParams(dimension_semantics=("parallel",)),
    )(*args)
    return jnp.transpose(out, (1, 0, 2))


def reference(src, params, num_heads):
    """Pure-JAX reference mirroring PyTorch semantics (dropout = identity)."""
    L, B, E = src.shape
    dh = E // num_heads
    wq, wk, wv = jnp.split(params["in_proj_w"], 3, axis=0)
    bq, bk, bv = jnp.split(params["in_proj_b"], 3, axis=0)
    x = jnp.transpose(src, (1, 0, 2))
    q = x @ wq.T + bq
    k = x @ wk.T + bk
    v = x @ wv.T + bv
    qh = q.reshape(B, L, num_heads, dh) / math.sqrt(dh)
    kh = k.reshape(B, L, num_heads, dh)
    vh = v.reshape(B, L, num_heads, dh)
    s = jnp.einsum('blhd,bmhd->bhlm', qh, kh)
    p = jax.nn.softmax(s, axis=-1)
    ctx = jnp.einsum('bhlm,bmhd->blhd', p, vh).reshape(B, L, E)
    attn = ctx @ params["out_w"].T + params["out_b"]

    def ln(z, g, b):
        mu = z.mean(-1, keepdims=True)
        var = ((z - mu) ** 2).mean(-1, keepdims=True)
        return (z - mu) / jnp.sqrt(var + 1e-5) * g + b

    h1 = ln(x + attn, params["g1"], params["beta1"])
    ff = jax.nn.gelu(h1 @ params["w1"].T + params["b1"], approximate=False)
    ff = ff @ params["w2"].T + params["b2"]
    out = ln(h1 + ff, params["g2"], params["beta2"])
    return jnp.transpose(out, (1, 0, 2))


if __name__ == "__main__":
    # Small shapes consistent with the module: c1 divisible by num_heads=8.
    L, B, c1, cm, num_heads = 8, 2, 64, 128, 8

    key = jax.random.PRNGKey(0)
    ks = jax.random.split(key, 9)
    f32 = jnp.float32
    params = dict(
        in_proj_w=0.02 * jax.random.normal(ks[0], (3 * c1, c1), f32),
        in_proj_b=0.01 * jax.random.normal(ks[1], (3 * c1,), f32),
        out_w=0.02 * jax.random.normal(ks[2], (c1, c1), f32),
        out_b=0.01 * jax.random.normal(ks[3], (c1,), f32),
        w1=0.02 * jax.random.normal(ks[4], (cm, c1), f32),
        b1=0.01 * jax.random.normal(ks[5], (cm,), f32),
        w2=0.02 * jax.random.normal(ks[6], (c1, cm), f32),
        b2=0.01 * jax.random.normal(ks[7], (c1,), f32),
        g1=jnp.ones((c1,), f32), beta1=jnp.zeros((c1,), f32),
        g2=jnp.ones((c1,), f32), beta2=jnp.zeros((c1,), f32),
    )

    src = jax.random.normal(ks[8], (L, B, c1), f32)   # (seq, batch, embed)

    out = temporal_encoder_layer(src, params, num_heads)
    out = jax.block_until_ready(out)

    ref = reference(src, params, num_heads)
    assert out.shape == (L, B, c1)
    # 2e-3 tolerance: approx reciprocal in the softmax denominator (EUP vrcp).
    assert jnp.allclose(out, ref, atol=2e-3, rtol=2e-3), "mismatch vs pure-JAX reference"

    print("KERNEL_OK")
</pallas_src>

<mosaic_0001>
module attributes {stable_mosaic.version = 11 : i64} {
  func.func @encoder_kernel(%arg0: i32, %arg1: memref<1x8x64xf32, #tpu.memory_space<vmem>>, %arg2: memref<64x192xf32, #tpu.memory_space<vmem>>, %arg3: memref<1x192xf32, #tpu.memory_space<vmem>>, %arg4: memref<64x64xf32, #tpu.memory_space<vmem>>, %arg5: memref<1x64xf32, #tpu.memory_space<vmem>>, %arg6: memref<64x128xf32, #tpu.memory_space<vmem>>, %arg7: memref<1x128xf32, #tpu.memory_space<vmem>>, %arg8: memref<128x64xf32, #tpu.memory_space<vmem>>, %arg9: memref<1x64xf32, #tpu.memory_space<vmem>>, %arg10: memref<1x64xf32, #tpu.memory_space<vmem>>, %arg11: memref<1x64xf32, #tpu.memory_space<vmem>>, %arg12: memref<1x64xf32, #tpu.memory_space<vmem>>, %arg13: memref<1x64xf32, #tpu.memory_space<vmem>>, %arg14: memref<1x8x64xf32, #tpu.memory_space<vmem>>) attributes {dimension_semantics = [#tpu.dimension_semantics<parallel>], iteration_bounds = array<i64: 2>, scalar_prefetch = 0 : i64, scratch_operands = 0 : i64, tpu.core_type = #tpu.core_type<tc>, window_params = [{transform_indices = @transform_0, window_bounds = array<i64: 1, 8, 64>}, {pipeline_mode = #tpu.pipeline_mode<synchronous>, transform_indices = @transform_1, window_bounds = array<i64: 64, 192>}, {pipeline_mode = #tpu.pipeline_mode<synchronous>, transform_indices = @transform_2, window_bounds = array<i64: 1, 192>}, {pipeline_mode = #tpu.pipeline_mode<synchronous>, transform_indices = @transform_3, window_bounds = array<i64: 64, 64>}, {pipeline_mode = #tpu.pipeline_mode<synchronous>, transform_indices = @transform_4, window_bounds = array<i64: 1, 64>}, {pipeline_mode = #tpu.pipeline_mode<synchronous>, transform_indices = @transform_5, window_bounds = array<i64: 64, 128>}, {pipeline_mode = #tpu.pipeline_mode<synchronous>, transform_indices = @transform_6, window_bounds = array<i64: 1, 128>}, {pipeline_mode = #tpu.pipeline_mode<synchronous>, transform_indices = @transform_7, window_bounds = array<i64: 128, 64>}, {pipeline_mode = #tpu.pipeline_mode<synchronous>, transform_indices = @transform_8, window_bounds = array<i64: 1, 64>}, {pipeline_mode = #tpu.pipeline_mode<synchronous>, transform_indices = @transform_9, window_bounds = array<i64: 1, 64>}, {pipeline_mode = #tpu.pipeline_mode<synchronous>, transform_indices = @transform_10, window_bounds = array<i64: 1, 64>}, {pipeline_mode = #tpu.pipeline_mode<synchronous>, transform_indices = @transform_11, window_bounds = array<i64: 1, 64>}, {pipeline_mode = #tpu.pipeline_mode<synchronous>, transform_indices = @transform_12, window_bounds = array<i64: 1, 64>}, {transform_indices = @transform_13, window_bounds = array<i64: 1, 8, 64>}]} {
    %c0 = arith.constant 0 : index
    %c0_0 = arith.constant 0 : index
    %c0_1 = arith.constant 0 : index
    %0 = vector.load %arg1[%c0, %c0_0, %c0_1] : memref<1x8x64xf32, #tpu.memory_space<vmem>>, vector<1x8x64xf32>
    %1 = vector.shape_cast %0 : vector<1x8x64xf32> to vector<8x64xf32>
    %c0_2 = arith.constant 0 : index
    %c0_3 = arith.constant 0 : index
    %2 = vector.load %arg2[%c0_2, %c0_3] : memref<64x192xf32, #tpu.memory_space<vmem>>, vector<64x192xf32>
    %cst = arith.constant dense<0.000000e+00> : vector<8x192xf32>
    %3 = tpu.matmul %1, %2, %cst {dimension_numbers = #tpu.dot_dimension_numbers<[1], [0], [0], [1], [0, 0, 1, 1], [], []>} : vector<8x64xf32>, vector<64x192xf32>, vector<8x192xf32> -> vector<8x192xf32>
    %c0_4 = arith.constant 0 : index
    %c0_5 = arith.constant 0 : index
    %4 = vector.load %arg3[%c0_4, %c0_5] : memref<1x192xf32, #tpu.memory_space<vmem>>, vector<1x192xf32>
    %5 = vector.broadcast %4 : vector<1x192xf32> to vector<8x192xf32>
    %6 = arith.addf %3, %5 : vector<8x192xf32>
    %7 = vector.extract_strided_slice %6 {offsets = [0, 0], sizes = [8, 8], strides = [1, 1]} : vector<8x192xf32> to vector<8x8xf32>
    %8 = vector.shape_cast %7 : vector<8x8xf32> to vector<1x8x8xf32>
    %9 = vector.extract_strided_slice %6 {offsets = [0, 8], sizes = [8, 8], strides = [1, 1]} : vector<8x192xf32> to vector<8x8xf32>
    %10 = vector.shape_cast %9 : vector<8x8xf32> to vector<1x8x8xf32>
    %11 = vector.extract_strided_slice %6 {offsets = [0, 16], sizes = [8, 8], strides = [1, 1]} : vector<8x192xf32> to vector<8x8xf32>
    %12 = vector.shape_cast %11 : vector<8x8xf32> to vector<1x8x8xf32>
    %13 = vector.extract_strided_slice %6 {offsets = [0, 24], sizes = [8, 8], strides = [1, 1]} : vector<8x192xf32> to vector<8x8xf32>
    %14 = vector.shape_cast %13 : vector<8x8xf32> to vector<1x8x8xf32>
    %15 = vector.extract_strided_slice %6 {offsets = [0, 32], sizes = [8, 8], strides = [1, 1]} : vector<8x192xf32> to vector<8x8xf32>
    %16 = vector.shape_cast %15 : vector<8x8xf32> to vector<1x8x8xf32>
    %17 = vector.extract_strided_slice %6 {offsets = [0, 40], sizes = [8, 8], strides = [1, 1]} : vector<8x192xf32> to vector<8x8xf32>
    %18 = vector.shape_cast %17 : vector<8x8xf32> to vector<1x8x8xf32>
    %19 = vector.extract_strided_slice %6 {offsets = [0, 48], sizes = [8, 8], strides = [1, 1]} : vector<8x192xf32> to vector<8x8xf32>
    %20 = vector.shape_cast %19 : vector<8x8xf32> to vector<1x8x8xf32>
    %21 = vector.extract_strided_slice %6 {offsets = [0, 56], sizes = [8, 8], strides = [1, 1]} : vector<8x192xf32> to vector<8x8xf32>
    %22 = vector.shape_cast %21 : vector<8x8xf32> to vector<1x8x8xf32>
    %23 = vector.shape_cast %8 : vector<1x8x8xf32> to vector<1x1x8x8xf32>
    %24 = vector.shape_cast %10 : vector<1x8x8xf32> to vector<1x1x8x8xf32>
    %25 = vector.shape_cast %12 : vector<1x8x8xf32> to vector<1x1x8x8xf32>
    %26 = vector.shape_cast %14 : vector<1x8x8xf32> to vector<1x1x8x8xf32>
    %27 = vector.shape_cast %16 : vector<1x8x8xf32> to vector<1x1x8x8xf32>
    %28 = vector.shape_cast %18 : vector<1x8x8xf32> to vector<1x1x8x8xf32>
    %29 = vector.shape_cast %20 : vector<1x8x8xf32> to vector<1x1x8x8xf32>
    %30 = vector.shape_cast %22 : vector<1x8x8xf32> to vector<1x1x8x8xf32>
    %31 = tpu.concatenate %23, %24, %25, %26, %27, %28, %29, %30 in 0 : vector<1x1x8x8xf32>, vector<1x1x8x8xf32>, vector<1x1x8x8xf32>, vector<1x1x8x8xf32>, vector<1x1x8x8xf32>, vector<1x1x8x8xf32>, vector<1x1x8x8xf32>, vector<1x1x8x8xf32> -> vector<8x1x8x8xf32>
    %32 = vector.shape_cast %31 : vector<8x1x8x8xf32> to vector<8x8x8xf32>
    %cst_6 = arith.constant 0.353553385 : f32
    %33 = vector.broadcast %cst_6 : f32 to vector<8x8x8xf32>
    %34 = arith.mulf %32, %33 : vector<8x8x8xf32>
    %35 = vector.extract_strided_slice %6 {offsets = [0, 64], sizes = [8, 8], strides = [1, 1]} : vector<8x192xf32> to vector<8x8xf32>
    %36 = vector.shape_cast %35 : vector<8x8xf32> to vector<1x8x8xf32>
    %37 = vector.extract_strided_slice %6 {offsets = [0, 72], sizes = [8, 8], strides = [1, 1]} : vector<8x192xf32> to vector<8x8xf32>
    %38 = vector.shape_cast %37 : vector<8x8xf32> to vector<1x8x8xf32>
    %39 = vector.extract_strided_slice %6 {offsets = [0, 80], sizes = [8, 8], strides = [1, 1]} : vector<8x192xf32> to vector<8x8xf32>
    %40 = vector.shape_cast %39 : vector<8x8xf32> to vector<1x8x8xf32>
    %41 = vector.extract_strided_slice %6 {offsets = [0, 88], sizes = [8, 8], strides = [1, 1]} : vector<8x192xf32> to vector<8x8xf32>
    %42 = vector.shape_cast %41 : vector<8x8xf32> to vector<1x8x8xf32>
    %43 = vector.extract_strided_slice %6 {offsets = [0, 96], sizes = [8, 8], strides = [1, 1]} : vector<8x192xf32> to vector<8x8xf32>
    %44 = vector.shape_cast %43 : vector<8x8xf32> to vector<1x8x8xf32>
    %45 = vector.extract_strided_slice %6 {offsets = [0, 104], sizes = [8, 8], strides = [1, 1]} : vector<8x192xf32> to vector<8x8xf32>
    %46 = vector.shape_cast %45 : vector<8x8xf32> to vector<1x8x8xf32>
    %47 = vector.extract_strided_slice %6 {offsets = [0, 112], sizes = [8, 8], strides = [1, 1]} : vector<8x192xf32> to vector<8x8xf32>
    %48 = vector.shape_cast %47 : vector<8x8xf32> to vector<1x8x8xf32>
    %49 = vector.extract_strided_slice %6 {offsets = [0, 120], sizes = [8, 8], strides = [1, 1]} : vector<8x192xf32> to vector<8x8xf32>
    %50 = vector.shape_cast %49 : vector<8x8xf32> to vector<1x8x8xf32>
    %51 = vector.shape_cast %36 : vector<1x8x8xf32> to vector<1x1x8x8xf32>
    %52 = vector.shape_cast %38 : vector<1x8x8xf32> to vector<1x1x8x8xf32>
    %53 = vector.shape_cast %40 : vector<1x8x8xf32> to vector<1x1x8x8xf32>
    %54 = vector.shape_cast %42 : vector<1x8x8xf32> to vector<1x1x8x8xf32>
    %55 = vector.shape_cast %44 : vector<1x8x8xf32> to vector<1x1x8x8xf32>
    %56 = vector.shape_cast %46 : vector<1x8x8xf32> to vector<1x1x8x8xf32>
    %57 = vector.shape_cast %48 : vector<1x8x8xf32> to vector<1x1x8x8xf32>
    %58 = vector.shape_cast %50 : vector<1x8x8xf32> to vector<1x1x8x8xf32>
    %59 = tpu.concatenate %51, %52, %53, %54, %55, %56, %57, %58 in 0 : vector<1x1x8x8xf32>, vector<1x1x8x8xf32>, vector<1x1x8x8xf32>, vector<1x1x8x8xf32>, vector<1x1x8x8xf32>, vector<1x1x8x8xf32>, vector<1x1x8x8xf32>, vector<1x1x8x8xf32> -> vector<8x1x8x8xf32>
    %60 = vector.shape_cast %59 : vector<8x1x8x8xf32> to vector<8x8x8xf32>
    %61 = vector.extract_strided_slice %6 {offsets = [0, 128], sizes = [8, 8], strides = [1, 1]} : vector<8x192xf32> to vector<8x8xf32>
    %62 = vector.shape_cast %61 : vector<8x8xf32> to vector<1x8x8xf32>
    %63 = vector.extract_strided_slice %6 {offsets = [0, 136], sizes = [8, 8], strides = [1, 1]} : vector<8x192xf32> to vector<8x8xf32>
    %64 = vector.shape_cast %63 : vector<8x8xf32> to vector<1x8x8xf32>
    %65 = vector.extract_strided_slice %6 {offsets = [0, 144], sizes = [8, 8], strides = [1, 1]} : vector<8x192xf32> to vector<8x8xf32>
    %66 = vector.shape_cast %65 : vector<8x8xf32> to vector<1x8x8xf32>
    %67 = vector.extract_strided_slice %6 {offsets = [0, 152], sizes = [8, 8], strides = [1, 1]} : vector<8x192xf32> to vector<8x8xf32>
    %68 = vector.shape_cast %67 : vector<8x8xf32> to vector<1x8x8xf32>
    %69 = vector.extract_strided_slice %6 {offsets = [0, 160], sizes = [8, 8], strides = [1, 1]} : vector<8x192xf32> to vector<8x8xf32>
    %70 = vector.shape_cast %69 : vector<8x8xf32> to vector<1x8x8xf32>
    %71 = vector.extract_strided_slice %6 {offsets = [0, 168], sizes = [8, 8], strides = [1, 1]} : vector<8x192xf32> to vector<8x8xf32>
    %72 = vector.shape_cast %71 : vector<8x8xf32> to vector<1x8x8xf32>
    %73 = vector.extract_strided_slice %6 {offsets = [0, 176], sizes = [8, 8], strides = [1, 1]} : vector<8x192xf32> to vector<8x8xf32>
    %74 = vector.shape_cast %73 : vector<8x8xf32> to vector<1x8x8xf32>
    %75 = vector.extract_strided_slice %6 {offsets = [0, 184], sizes = [8, 8], strides = [1, 1]} : vector<8x192xf32> to vector<8x8xf32>
    %76 = vector.shape_cast %75 : vector<8x8xf32> to vector<1x8x8xf32>
    %77 = vector.shape_cast %62 : vector<1x8x8xf32> to vector<1x1x8x8xf32>
    %78 = vector.shape_cast %64 : vector<1x8x8xf32> to vector<1x1x8x8xf32>
    %79 = vector.shape_cast %66 : vector<1x8x8xf32> to vector<1x1x8x8xf32>
    %80 = vector.shape_cast %68 : vector<1x8x8xf32> to vector<1x1x8x8xf32>
    %81 = vector.shape_cast %70 : vector<1x8x8xf32> to vector<1x1x8x8xf32>
    %82 = vector.shape_cast %72 : vector<1x8x8xf32> to vector<1x1x8x8xf32>
    %83 = vector.shape_cast %74 : vector<1x8x8xf32> to vector<1x1x8x8xf32>
    %84 = vector.shape_cast %76 : vector<1x8x8xf32> to vector<1x1x8x8xf32>
    %85 = tpu.concatenate %77, %78, %79, %80, %81, %82, %83, %84 in 0 : vector<1x1x8x8xf32>, vector<1x1x8x8xf32>, vector<1x1x8x8xf32>, vector<1x1x8x8xf32>, vector<1x1x8x8xf32>, vector<1x1x8x8xf32>, vector<1x1x8x8xf32>, vector<1x1x8x8xf32> -> vector<8x1x8x8xf32>
    %86 = vector.shape_cast %85 : vector<8x1x8x8xf32> to vector<8x8x8xf32>
    "tpu.trace_start"() <{level = 10 : i32, message = "gld,gmd->glm"}> : () -> ()
    %cst_7 = arith.constant dense<0.000000e+00> : vector<8x8x8xf32>
    %87 = tpu.matmul %34, %60, %cst_7 {dimension_numbers = #tpu.dot_dimension_numbers<[2], [2], [1], [1], [0, 0, 0, 1, 1, 1], [0], [0]>} : vector<8x8x8xf32>, vector<8x8x8xf32>, vector<8x8x8xf32> -> vector<8x8x8xf32>
    "tpu.trace_stop"() : () -> ()
    %cst_8 = arith.constant dense<0xFF800000> : vector<8x8xf32>
    %88 = vector.multi_reduction <maximumf>, %87, %cst_8 [2] : vector<8x8x8xf32> to vector<8x8xf32>
    %89 = vector.shape_cast %88 : vector<8x8xf32> to vector<8x8x1xf32>
    %90 = vector.broadcast %89 : vector<8x8x1xf32> to vector<8x8x8xf32>
    %91 = arith.subf %87, %90 : vector<8x8x8xf32>
    %92 = math.exp %91 : vector<8x8x8xf32>
    %cst_9 = arith.constant dense<0.000000e+00> : vector<8x8xf32>
    %93 = vector.multi_reduction <add>, %92, %cst_9 [2] : vector<8x8x8xf32> to vector<8x8xf32>
    %94 = vector.shape_cast %93 : vector<8x8xf32> to vector<8x8x1xf32>
    %95 = tpu.reciprocal %94 {approx = true} : vector<8x8x1xf32> -> vector<8x8x1xf32>
    %96 = vector.broadcast %95 : vector<8x8x1xf32> to vector<8x8x8xf32>
    %97 = arith.mulf %92, %96 : vector<8x8x8xf32>
    "tpu.trace_start"() <{level = 10 : i32, message = "glm,gmd->gld"}> : () -> ()
    %cst_10 = arith.constant dense<0.000000e+00> : vector<8x8x8xf32>
    %98 = tpu.matmul %97, %86, %cst_10 {dimension_numbers = #tpu.dot_dimension_numbers<[2], [1], [1], [2], [0, 0, 0, 1, 1, 2], [0], [0]>} : vector<8x8x8xf32>, vector<8x8x8xf32>, vector<8x8x8xf32> -> vector<8x8x8xf32>
    "tpu.trace_stop"() : () -> ()
    %99 = vector.shape_cast %98 : vector<8x8x8xf32> to vector<8x1x8x8xf32>
    %100 = vector.extract_strided_slice %99 {offsets = [0, 0, 0, 0], sizes = [1, 1, 8, 8], strides = [1, 1, 1, 1]} : vector<8x1x8x8xf32> to vector<1x1x8x8xf32>
    %101 = vector.shape_cast %100 : vector<1x1x8x8xf32> to vector<1x8x8xf32>
    %102 = vector.shape_cast %101 : vector<1x8x8xf32> to vector<8x8xf32>
    %103 = vector.extract_strided_slice %99 {offsets = [1, 0, 0, 0], sizes = [1, 1, 8, 8], strides = [1, 1, 1, 1]} : vector<8x1x8x8xf32> to vector<1x1x8x8xf32>
    %104 = vector.shape_cast %103 : vector<1x1x8x8xf32> to vector<1x8x8xf32>
    %105 = vector.shape_cast %104 : vector<1x8x8xf32> to vector<8x8xf32>
    %106 = vector.extract_strided_slice %99 {offsets = [2, 0, 0, 0], sizes = [1, 1, 8, 8], strides = [1, 1, 1, 1]} : vector<8x1x8x8xf32> to vector<1x1x8x8xf32>
    %107 = vector.shape_cast %106 : vector<1x1x8x8xf32> to vector<1x8x8xf32>
    %108 = vector.shape_cast %107 : vector<1x8x8xf32> to vector<8x8xf32>
    %109 = vector.extract_strided_slice %99 {offsets = [3, 0, 0, 0], sizes = [1, 1, 8, 8], strides = [1, 1, 1, 1]} : vector<8x1x8x8xf32> to vector<1x1x8x8xf32>
    %110 = vector.shape_cast %109 : vector<1x1x8x8xf32> to vector<1x8x8xf32>
    %111 = vector.shape_cast %110 : vector<1x8x8xf32> to vector<8x8xf32>
    %112 = vector.extract_strided_slice %99 {offsets = [4, 0, 0, 0], sizes = [1, 1, 8, 8], strides = [1, 1, 1, 1]} : vector<8x1x8x8xf32> to vector<1x1x8x8xf32>
    %113 = vector.shape_cast %112 : vector<1x1x8x8xf32> to vector<1x8x8xf32>
    %114 = vector.shape_cast %113 : vector<1x8x8xf32> to vector<8x8xf32>
    %115 = vector.extract_strided_slice %99 {offsets = [5, 0, 0, 0], sizes = [1, 1, 8, 8], strides = [1, 1, 1, 1]} : vector<8x1x8x8xf32> to vector<1x1x8x8xf32>
    %116 = vector.shape_cast %115 : vector<1x1x8x8xf32> to vector<1x8x8xf32>
    %117 = vector.shape_cast %116 : vector<1x8x8xf32> to vector<8x8xf32>
    %118 = vector.extract_strided_slice %99 {offsets = [6, 0, 0, 0], sizes = [1, 1, 8, 8], strides = [1, 1, 1, 1]} : vector<8x1x8x8xf32> to vector<1x1x8x8xf32>
    %119 = vector.shape_cast %118 : vector<1x1x8x8xf32> to vector<1x8x8xf32>
    %120 = vector.shape_cast %119 : vector<1x8x8xf32> to vector<8x8xf32>
    %121 = vector.extract_strided_slice %99 {offsets = [7, 0, 0, 0], sizes = [1, 1, 8, 8], strides = [1, 1, 1, 1]} : vector<8x1x8x8xf32> to vector<1x1x8x8xf32>
    %122 = vector.shape_cast %121 : vector<1x1x8x8xf32> to vector<1x8x8xf32>
    %123 = vector.shape_cast %122 : vector<1x8x8xf32> to vector<8x8xf32>
    %124 = tpu.concatenate %102, %105, %108, %111, %114, %117, %120, %123 in 1 : vector<8x8xf32>, vector<8x8xf32>, vector<8x8xf32>, vector<8x8xf32>, vector<8x8xf32>, vector<8x8xf32>, vector<8x8xf32>, vector<8x8xf32> -> vector<8x64xf32>
    %c0_11 = arith.constant 0 : index
    %c0_12 = arith.constant 0 : index
    %125 = vector.load %arg4[%c0_11, %c0_12] : memref<64x64xf32, #tpu.memory_space<vmem>>, vector<64x64xf32>
    %cst_13 = arith.constant dense<0.000000e+00> : vector<8x64xf32>
    %126 = tpu.matmul %124, %125, %cst_13 {dimension_numbers = #tpu.dot_dimension_numbers<[1], [0], [0], [1], [0, 0, 1, 1], [], []>} : vector<8x64xf32>, vector<64x64xf32>, vector<8x64xf32> -> vector<8x64xf32>
    %c0_14 = arith.constant 0 : index
    %c0_15 = arith.constant 0 : index
    %127 = vector.load %arg5[%c0_14, %c0_15] : memref<1x64xf32, #tpu.memory_space<vmem>>, vector<1x64xf32>
    %128 = vector.broadcast %127 : vector<1x64xf32> to vector<8x64xf32>
    %129 = arith.addf %126, %128 : vector<8x64xf32>
    %130 = arith.addf %1, %129 : vector<8x64xf32>
    %c0_16 = arith.constant 0 : index
    %c0_17 = arith.constant 0 : index
    %131 = vector.load %arg10[%c0_16, %c0_17] : memref<1x64xf32, #tpu.memory_space<vmem>>, vector<1x64xf32>
    %c0_18 = arith.constant 0 : index
    %c0_19 = arith.constant 0 : index
    %132 = vector.load %arg11[%c0_18, %c0_19] : memref<1x64xf32, #tpu.memory_space<vmem>>, vector<1x64xf32>
    %cst_20 = arith.constant dense<0.000000e+00> : vector<8xf32>
    %133 = vector.multi_reduction <add>, %130, %cst_20 [1] : vector<8x64xf32> to vector<8xf32>
    %134 = vector.shape_cast %133 : vector<8xf32> to vector<8x1xf32>
    %cst_21 = arith.constant 6.400000e+01 : f32
    %135 = vector.broadcast %cst_21 : f32 to vector<8x1xf32>
    %136 = arith.divf %134, %135 : vector<8x1xf32>
    %137 = vector.broadcast %136 : vector<8x1xf32> to vector<8x64xf32>
    %138 = arith.subf %130, %137 : vector<8x64xf32>
    %139 = arith.mulf %138, %138 : vector<8x64xf32>
    %cst_22 = arith.constant dense<0.000000e+00> : vector<8xf32>
    %140 = vector.multi_reduction <add>, %139, %cst_22 [1] : vector<8x64xf32> to vector<8xf32>
    %141 = vector.shape_cast %140 : vector<8xf32> to vector<8x1xf32>
    %cst_23 = arith.constant 6.400000e+01 : f32
    %142 = vector.broadcast %cst_23 : f32 to vector<8x1xf32>
    %143 = arith.divf %141, %142 : vector<8x1xf32>
    %144 = vector.broadcast %136 : vector<8x1xf32> to vector<8x64xf32>
    %145 = arith.subf %130, %144 : vector<8x64xf32>
    %cst_24 = arith.constant 9.99999974E-6 : f32
    %146 = vector.broadcast %cst_24 : f32 to vector<8x1xf32>
    %147 = arith.addf %143, %146 : vector<8x1xf32>
    %148 = math.rsqrt %147 : vector<8x1xf32>
    %149 = vector.broadcast %148 : vector<8x1xf32> to vector<8x64xf32>
    %150 = arith.mulf %145, %149 : vector<8x64xf32>
    %151 = vector.broadcast %131 : vector<1x64xf32> to vector<8x64xf32>
    %152 = arith.mulf %150, %151 : vector<8x64xf32>
    %153 = vector.broadcast %132 : vector<1x64xf32> to vector<8x64xf32>
    %154 = arith.addf %152, %153 : vector<8x64xf32>
    %c0_25 = arith.constant 0 : index
    %c0_26 = arith.constant 0 : index
    %155 = vector.load %arg6[%c0_25, %c0_26] : memref<64x128xf32, #tpu.memory_space<vmem>>, vector<64x128xf32>
    %cst_27 = arith.constant dense<0.000000e+00> : vector<8x128xf32>
    %156 = tpu.matmul %154, %155, %cst_27 {dimension_numbers = #tpu.dot_dimension_numbers<[1], [0], [0], [1], [0, 0, 1, 1], [], []>} : vector<8x64xf32>, vector<64x128xf32>, vector<8x128xf32> -> vector<8x128xf32>
    %c0_28 = arith.constant 0 : index
    %c0_29 = arith.constant 0 : index
    %157 = vector.load %arg7[%c0_28, %c0_29] : memref<1x128xf32, #tpu.memory_space<vmem>>, vector<1x128xf32>
    %158 = vector.broadcast %157 : vector<1x128xf32> to vector<8x128xf32>
    %159 = arith.addf %156, %158 : vector<8x128xf32>
    %cst_30 = arith.constant 5.000000e-01 : f32
    %160 = vector.broadcast %cst_30 : f32 to vector<8x128xf32>
    %161 = arith.mulf %160, %159 : vector<8x128xf32>
    %cst_31 = arith.constant 0.707106769 : f32
    %162 = vector.broadcast %cst_31 : f32 to vector<8x128xf32>
    %163 = arith.mulf %159, %162 : vector<8x128xf32>
    %164 = math.erf %163 : vector<8x128xf32>
    %cst_32 = arith.constant 1.000000e+00 : f32
    %165 = vector.broadcast %cst_32 : f32 to vector<8x128xf32>
    %166 = arith.addf %165, %164 : vector<8x128xf32>
    %167 = arith.mulf %161, %166 : vector<8x128xf32>
    %c0_33 = arith.constant 0 : index
    %c0_34 = arith.constant 0 : index
    %168 = vector.load %arg8[%c0_33, %c0_34] : memref<128x64xf32, #tpu.memory_space<vmem>>, vector<128x64xf32>
    %cst_35 = arith.constant dense<0.000000e+00> : vector<8x64xf32>
    %169 = tpu.matmul %167, %168, %cst_35 {dimension_numbers = #tpu.dot_dimension_numbers<[1], [0], [0], [1], [0, 0, 1, 1], [], []>} : vector<8x128xf32>, vector<128x64xf32>, vector<8x64xf32> -> vector<8x64xf32>
    %c0_36 = arith.constant 0 : index
    %c0_37 = arith.constant 0 : index
    %170 = vector.load %arg9[%c0_36, %c0_37] : memref<1x64xf32, #tpu.memory_space<vmem>>, vector<1x64xf32>
    %171 = vector.broadcast %170 : vector<1x64xf32> to vector<8x64xf32>
    %172 = arith.addf %169, %171 : vector<8x64xf32>
    %173 = arith.addf %154, %172 : vector<8x64xf32>
    %c0_38 = arith.constant 0 : index
    %c0_39 = arith.constant 0 : index
    %174 = vector.load %arg12[%c0_38, %c0_39] : memref<1x64xf32, #tpu.memory_space<vmem>>, vector<1x64xf32>
    %c0_40 = arith.constant 0 : index
    %c0_41 = arith.constant 0 : index
    %175 = vector.load %arg13[%c0_40, %c0_41] : memref<1x64xf32, #tpu.memory_space<vmem>>, vector<1x64xf32>
    %cst_42 = arith.constant dense<0.000000e+00> : vector<8xf32>
    %176 = vector.multi_reduction <add>, %173, %cst_42 [1] : vector<8x64xf32> to vector<8xf32>
    %177 = vector.shape_cast %176 : vector<8xf32> to vector<8x1xf32>
    %cst_43 = arith.constant 6.400000e+01 : f32
    %178 = vector.broadcast %cst_43 : f32 to vector<8x1xf32>
    %179 = arith.divf %177, %178 : vector<8x1xf32>
    %180 = vector.broadcast %179 : vector<8x1xf32> to vector<8x64xf32>
    %181 = arith.subf %173, %180 : vector<8x64xf32>
    %182 = arith.mulf %181, %181 : vector<8x64xf32>
    %cst_44 = arith.constant dense<0.000000e+00> : vector<8xf32>
    %183 = vector.multi_reduction <add>, %182, %cst_44 [1] : vector<8x64xf32> to vector<8xf32>
    %184 = vector.shape_cast %183 : vector<8xf32> to vector<8x1xf32>
    %cst_45 = arith.constant 6.400000e+01 : f32
    %185 = vector.broadcast %cst_45 : f32 to vector<8x1xf32>
    %186 = arith.divf %184, %185 : vector<8x1xf32>
    %187 = vector.broadcast %179 : vector<8x1xf32> to vector<8x64xf32>
    %188 = arith.subf %173, %187 : vector<8x64xf32>
    %cst_46 = arith.constant 9.99999974E-6 : f32
    %189 = vector.broadcast %cst_46 : f32 to vector<8x1xf32>
    %190 = arith.addf %186, %189 : vector<8x1xf32>
    %191 = math.rsqrt %190 : vector<8x1xf32>
    %192 = vector.broadcast %191 : vector<8x1xf32> to vector<8x64xf32>
    %193 = arith.mulf %188, %192 : vector<8x64xf32>
    %194 = vector.broadcast %174 : vector<1x64xf32> to vector<8x64xf32>
    %195 = arith.mulf %193, %194 : vector<8x64xf32>
    %196 = vector.broadcast %175 : vector<1x64xf32> to vector<8x64xf32>
    %197 = arith.addf %195, %196 : vector<8x64xf32>
    %198 = vector.shape_cast %197 : vector<8x64xf32> to vector<1x8x64xf32>
    %c0_47 = arith.constant 0 : index
    %c0_48 = arith.constant 0 : index
    %c0_49 = arith.constant 0 : index
    %199 = vector.load %arg14[%c0_47, %c0_48, %c0_49] : memref<1x8x64xf32, #tpu.memory_space<vmem>>, vector<1x8x64xf32>
    tpu.vector_store %arg14[%c0_47, %c0_48, %c0_49], %198 {strides = array<i32>} : memref<1x8x64xf32, #tpu.memory_space<vmem>>, vector<1x8x64xf32>,
    return
  }
  func.func @transform_0(%arg0: i32) -> (i32, i32, i32) {
    %c0_i32 = arith.constant 0 : i32
    %c0_i32_0 = arith.constant 0 : i32
    %c0_i32_1 = arith.constant 0 : i32
    return %arg0, %c0_i32, %c0_i32_0 : i32, i32, i32
  }
  func.func @transform_1(%arg0: i32) -> (i32, i32) {
    %c0_i32 = arith.constant 0 : i32
    %c0_i32_0 = arith.constant 0 : i32
    %c0_i32_1 = arith.constant 0 : i32
    return %c0_i32, %c0_i32_0 : i32, i32
  }
  func.func @transform_2(%arg0: i32) -> (i32, i32) {
    %c0_i32 = arith.constant 0 : i32
    %c0_i32_0 = arith.constant 0 : i32
    %c0_i32_1 = arith.constant 0 : i32
    return %c0_i32, %c0_i32_0 : i32, i32
  }
  func.func @transform_3(%arg0: i32) -> (i32, i32) {
    %c0_i32 = arith.constant 0 : i32
    %c0_i32_0 = arith.constant 0 : i32
    %c0_i32_1 = arith.constant 0 : i32
    return %c0_i32, %c0_i32_0 : i32, i32
  }
  func.func @transform_4(%arg0: i32) -> (i32, i32) {
    %c0_i32 = arith.constant 0 : i32
    %c0_i32_0 = arith.constant 0 : i32
    %c0_i32_1 = arith.constant 0 : i32
    return %c0_i32, %c0_i32_0 : i32, i32
  }
  func.func @transform_5(%arg0: i32) -> (i32, i32) {
    %c0_i32 = arith.constant 0 : i32
    %c0_i32_0 = arith.constant 0 : i32
    %c0_i32_1 = arith.constant 0 : i32
    return %c0_i32, %c0_i32_0 : i32, i32
  }
  func.func @transform_6(%arg0: i32) -> (i32, i32) {
    %c0_i32 = arith.constant 0 : i32
    %c0_i32_0 = arith.constant 0 : i32
    %c0_i32_1 = arith.constant 0 : i32
    return %c0_i32, %c0_i32_0 : i32, i32
  }
  func.func @transform_7(%arg0: i32) -> (i32, i32) {
    %c0_i32 = arith.constant 0 : i32
    %c0_i32_0 = arith.constant 0 : i32
    %c0_i32_1 = arith.constant 0 : i32
    return %c0_i32, %c0_i32_0 : i32, i32
  }
  func.func @transform_8(%arg0: i32) -> (i32, i32) {
    %c0_i32 = arith.constant 0 : i32
    %c0_i32_0 = arith.constant 0 : i32
    %c0_i32_1 = arith.constant 0 : i32
    return %c0_i32, %c0_i32_0 : i32, i32
  }
  func.func @transform_9(%arg0: i32) -> (i32, i32) {
    %c0_i32 = arith.constant 0 : i32
    %c0_i32_0 = arith.constant 0 : i32
    %c0_i32_1 = arith.constant 0 : i32
    return %c0_i32, %c0_i32_0 : i32, i32
  }
  func.func @transform_10(%arg0: i32) -> (i32, i32) {
    %c0_i32 = arith.constant 0 : i32
    %c0_i32_0 = arith.constant 0 : i32
    %c0_i32_1 = arith.constant 0 : i32
    return %c0_i32, %c0_i32_0 : i32, i32
  }
  func.func @transform_11(%arg0: i32) -> (i32, i32) {
    %c0_i32 = arith.constant 0 : i32
    %c0_i32_0 = arith.constant 0 : i32
    %c0_i32_1 = arith.constant 0 : i32
    return %c0_i32, %c0_i32_0 : i32, i32
  }
  func.func @transform_12(%arg0: i32) -> (i32, i32) {
    %c0_i32 = arith.constant 0 : i32
    %c0_i32_0 = arith.constant 0 : i32
    %c0_i32_1 = arith.constant 0 : i32
    return %c0_i32, %c0_i32_0 : i32, i32
  }
  func.func @transform_13(%arg0: i32) -> (i32, i32, i32) {
    %c0_i32 = arith.constant 0 : i32
    %c0_i32_0 = arith.constant 0 : i32
    %c0_i32_1 = arith.constant 0 : i32
    return %arg0, %c0_i32, %c0_i32_0 : i32, i32, i32
  }
}

</mosaic_0001>

<llo_original>
// kernel: tpu_custom_call.1
$region0: #{tpu_custom_call.1}
  #allocation0 [shape = 'u32[]', space=smem, size = 0x4, offset = 0x4, fixed_abs, tag = 'smem constant byte address 0x4 - core index']
  #allocation1 [shape = 'u32[144,128]{1,0:T(1,128)}', space=vmem, size = 0x12000, scoped, tag = 'internal scratch']
  %s0 = inlined_call_operand.hbm [shape: f32[2,8,64], index: 0, kind: input, shape index: {}]
  %s1 = inlined_call_operand.vmem [shape: f32[64,192], index: 1, kind: input, shape index: {}]
  %s2 = inlined_call_operand.vmem [shape: f32[1,192], index: 2, kind: input, shape index: {}]
  %s3 = inlined_call_operand.vmem [shape: f32[64,64], index: 3, kind: input, shape index: {}]
  %s4 = inlined_call_operand.vmem [shape: f32[1,64], index: 4, kind: input, shape index: {}]
  %s5 = inlined_call_operand.hbm [shape: f32[64,128], index: 5, kind: input, shape index: {}]
  %s6 = inlined_call_operand.vmem [shape: f32[1,128], index: 6, kind: input, shape index: {}]
  %s7 = inlined_call_operand.vmem [shape: f32[128,64], index: 7, kind: input, shape index: {}]
  %s8 = inlined_call_operand.vmem [shape: f32[1,64], index: 8, kind: input, shape index: {}]
  %s9 = inlined_call_operand.vmem [shape: f32[1,64], index: 9, kind: input, shape index: {}]
  %s10 = inlined_call_operand.vmem [shape: f32[1,64], index: 10, kind: input, shape index: {}]
  %s11 = inlined_call_operand.vmem [shape: f32[1,64], index: 11, kind: input, shape index: {}]
  %s12 = inlined_call_operand.vmem [shape: f32[1,64], index: 12, kind: input, shape index: {}]
  %s13 = inlined_call_operand.hbm [shape: f32[2,8,64], index: 13, kind: output, shape index: {}]
  %s14 = sld [smem:[#allocation0]]
  $region93: #{tpu_custom_call.1} parent=0
    _
  %s16 = ssub.s32 1, %s14
  %s17 = scalar_select 0, %s16, %s14
  $region1: #{tpu_custom_call.1} parent=0
    #allocation2 [shape = 'u8[8192]{0}', space=vmem, size = 0x2000, scoped, tag = 'input window, operand 0']
    #allocation3 [shape = 's32[2]{0}', space=sflag, size = 0x8, scoped, tag = 'scoped memory for tpu_custom_call.1']
    #allocation4 [shape = 's32[2]{0}', space=sflag, size = 0x8, scoped, tag = 'scoped memory for tpu_custom_call.1']
    #allocation5 [shape = 'u8[32768]{0}', space=vmem, size = 0x8000, scoped, tag = 'input window, operand 5, single buffered']
    #allocation6 [shape = 's32[1]{0}', space=sflag, size = 0x4, scoped, tag = 'scoped memory for tpu_custom_call.1']
    #allocation7 [shape = 'u8[8192]{0}', space=vmem, size = 0x2000, scoped, tag = 'output window, operand 0']
    %18 = vsyncpa [#allocation3], 0
    %s19 = scalar_lea.sflag [#allocation3], 1
    %20 = vsyncpa %s19, 0
    %21 = vsyncpa [#allocation6], 0
    %22 = vsyncpa [#allocation4], 0
    %s23 = scalar_lea.sflag [#allocation4], 1
    %24 = vsyncpa %s23, 0
    loop: start=0, step=1, limit=4
    $region2: #{tpu_custom_call.1} parent=1 // loop_pre_header
      _
    $region3: #{tpu_custom_call.1} parent=1 // loop_header
      %s26 = sphi 0, %s30
      %p27 = scmp.ge.s32.totalorder %s26, 4
      %s36 = sphi 0, %s38
      %s39 = sphi 0, %s36
      %s40 = sphi 0, %s39
      %s56 = sphi 0, %s40
      %s60 = sphi 0, %s60
      %s62 = sphi 0, %s60
      %s63 = sphi 0, %s62
      %s77 = sphi 0, %s63
      %s81 = sphi 0, %s81
      %s83 = sphi 0, %s81
      %s84 = sphi 0, %s83
      %s98 = sphi 0, %s84
      %s102 = sphi 0, %s102
      %s104 = sphi 0, %s102
      %s105 = sphi 0, %s104
      %s119 = sphi 0, %s105
      %s123 = sphi 0, %s123
      %s125 = sphi 0, %s123
      %s126 = sphi 0, %s125
      %s140 = sphi 0, %s126
      %s144 = sphi 0, %s144
      %s146 = sphi 0, %s144
      %s147 = sphi 0, %s146
      %s161 = sphi 0, %s147
      %s165 = sphi 0, %s165
      %s167 = sphi 0, %s165
      %s168 = sphi 0, %s167
      %s182 = sphi 0, %s168
      %s186 = sphi 0, %s186
      %s188 = sphi 0, %s186
      %s189 = sphi 0, %s188
      %s203 = sphi 0, %s189
      %s207 = sphi 0, %s207
      %s209 = sphi 0, %s207
      %s210 = sphi 0, %s209
      %s224 = sphi 0, %s210
      %s228 = sphi 0, %s228
      %s230 = sphi 0, %s228
      %s231 = sphi 0, %s230
      %s245 = sphi 0, %s231
      %s249 = sphi 0, %s249
      %s251 = sphi 0, %s249
      %s252 = sphi 0, %s251
      %s266 = sphi 0, %s252
      %s270 = sphi 0, %s270
      %s272 = sphi 0, %s270
      %s273 = sphi 0, %s272
      %s287 = sphi 0, %s273
      %s291 = sphi 0, %s291
      %s293 = sphi 0, %s291
      %s294 = sphi 0, %s293
      %s308 = sphi 0, %s294
      %s314 = sphi 0, %s316
      %s317 = sphi 0, %s314
      %s318 = sphi 0, %s317
      %s334 = sphi 0, %s318
    $region4: #{tpu_custom_call.1} parent=1 // loop_header_branch
      %29 = sbr.rel (%p27) target = $region8
    $region5: #{tpu_custom_call.1} parent=1 // loop_body
      %s31 = ssub.s32 %s26, 1
      %s32 = ssub.s32 %s26, 2
      %s33 = sadd.s32 %s26, 1
      %s34 = ssub.s32 %s26, %s33
      %p35 = scmp.eq.s32.totalorder %s34, 0
      %s37 = sadd.s32 %s36, 1
      %s38 = scalar_select %p35, %s36, %s37
      %p41 = pneg %p35
      %p42 = scmp.eq.s32.totalorder %s26, 1
      %p43 = por %p41, %p42
      %p44 = scmp.ne.s32.totalorder %s36, %s39
      %p45 = scmp.eq.s32.totalorder %s26, 0
      %p46 = por %p44, %p45
      %p47 = scmp.ne.s32.totalorder %s36, %s39
      %p48 = scmp.eq.s32.totalorder %s31, 1
      %p49 = por %p47, %p48
      %p50 = scmp.ne.s32.totalorder %s39, %s40
      %p51 = scmp.eq.s32.totalorder %s31, 0
      %p52 = por %p50, %p51
      %p53 = scmp.ne.s32.totalorder %s39, %s40
      %p54 = scmp.eq.s32.totalorder %s32, 1
      %p55 = por %p53, %p54
      %p57 = scmp.ne.s32.totalorder %s40, %s56
      %p58 = scmp.eq.s32.totalorder %s32, 0
      %p59 = por %p57, %p58
      %s61 = sadd.s32 %s60, 1
      %p64 = scmp.eq.s32.totalorder %s26, 1
      %p65 = scmp.ne.s32.totalorder %s60, %s62
      %p66 = scmp.eq.s32.totalorder %s26, 0
      %p67 = por %p65, %p66
      %p68 = scmp.ne.s32.totalorder %s60, %s62
      %p69 = scmp.eq.s32.totalorder %s31, 1
      %p70 = por %p68, %p69
      %p71 = scmp.ne.s32.totalorder %s62, %s63
      %p72 = scmp.eq.s32.totalorder %s31, 0
      %p73 = por %p71, %p72
      %p74 = scmp.ne.s32.totalorder %s62, %s63
      %p75 = scmp.eq.s32.totalorder %s32, 1
      %p76 = por %p74, %p75
      %p78 = scmp.ne.s32.totalorder %s63, %s77
      %p79 = scmp.eq.s32.totalorder %s32, 0
      %p80 = por %p78, %p79
      %s82 = sadd.s32 %s81, 1
      %p85 = scmp.eq.s32.totalorder %s26, 1
      %p86 = scmp.ne.s32.totalorder %s81, %s83
      %p87 = scmp.eq.s32.totalorder %s26, 0
      %p88 = por %p86, %p87
      %p89 = scmp.ne.s32.totalorder %s81, %s83
      %p90 = scmp.eq.s32.totalorder %s31, 1
      %p91 = por %p89, %p90
      %p92 = scmp.ne.s32.totalorder %s83, %s84
      %p93 = scmp.eq.s32.totalorder %s31, 0
      %p94 = por %p92, %p93
      %p95 = scmp.ne.s32.totalorder %s83, %s84
      %p96 = scmp.eq.s32.totalorder %s32, 1
      %p97 = por %p95, %p96
      %p99 = scmp.ne.s32.totalorder %s84, %s98
      %p100 = scmp.eq.s32.totalorder %s32, 0
      %p101 = por %p99, %p100
      %s103 = sadd.s32 %s102, 1
      %p106 = scmp.eq.s32.totalorder %s26, 1
      %p107 = scmp.ne.s32.totalorder %s102, %s104
      %p108 = scmp.eq.s32.totalorder %s26, 0
      %p109 = por %p107, %p108
      %p110 = scmp.ne.s32.totalorder %s102, %s104
      %p111 = scmp.eq.s32.totalorder %s31, 1
      %p112 = por %p110, %p111
      %p113 = scmp.ne.s32.totalorder %s104, %s105
      %p114 = scmp.eq.s32.totalorder %s31, 0
      %p115 = por %p113, %p114
      %p116 = scmp.ne.s32.totalorder %s104, %s105
      %p117 = scmp.eq.s32.totalorder %s32, 1
      %p118 = por %p116, %p117
      %p120 = scmp.ne.s32.totalorder %s105, %s119
      %p121 = scmp.eq.s32.totalorder %s32, 0
      %p122 = por %p120, %p121
      %s124 = sadd.s32 %s123, 1
      %p127 = scmp.eq.s32.totalorder %s26, 1
      %p128 = scmp.ne.s32.totalorder %s123, %s125
      %p129 = scmp.eq.s32.totalorder %s26, 0
      %p130 = por %p128, %p129
      %p131 = scmp.ne.s32.totalorder %s123, %s125
      %p132 = scmp.eq.s32.totalorder %s31, 1
      %p133 = por %p131, %p132
      %p134 = scmp.ne.s32.totalorder %s125, %s126
      %p135 = scmp.eq.s32.totalorder %s31, 0
      %p136 = por %p134, %p135
      %p137 = scmp.ne.s32.totalorder %s125, %s126
      %p138 = scmp.eq.s32.totalorder %s32, 1
      %p139 = por %p137, %p138
      %p141 = scmp.ne.s32.totalorder %s126, %s140
      %p142 = scmp.eq.s32.totalorder %s32, 0
      %p143 = por %p141, %p142
      %s145 = sadd.s32 %s144, 1
      %p148 = scmp.eq.s32.totalorder %s26, 1
      %p149 = scmp.ne.s32.totalorder %s144, %s146
      %p150 = scmp.eq.s32.totalorder %s26, 0
      %p151 = por %p149, %p150
      %p152 = scmp.ne.s32.totalorder %s144, %s146
      %p153 = scmp.eq.s32.totalorder %s31, 1
      %p154 = por %p152, %p153
      %p155 = scmp.ne.s32.totalorder %s146, %s147
      %p156 = scmp.eq.s32.totalorder %s31, 0
      %p157 = por %p155, %p156
      %p158 = scmp.ne.s32.totalorder %s146, %s147
      %p159 = scmp.eq.s32.totalorder %s32, 1
      %p160 = por %p158, %p159
      %p162 = scmp.ne.s32.totalorder %s147, %s161
      %p163 = scmp.eq.s32.totalorder %s32, 0
      %p164 = por %p162, %p163
      %s166 = sadd.s32 %s165, 1
      %p169 = scmp.eq.s32.totalorder %s26, 1
      %p170 = scmp.ne.s32.totalorder %s165, %s167
      %p171 = scmp.eq.s32.totalorder %s26, 0
      %p172 = por %p170, %p171
      %p173 = scmp.ne.s32.totalorder %s165, %s167
      %p174 = scmp.eq.s32.totalorder %s31, 1
      %p175 = por %p173, %p174
      %p176 = scmp.ne.s32.totalorder %s167, %s168
      %p177 = scmp.eq.s32.totalorder %s31, 0
      %p178 = por %p176, %p177
      %p179 = scmp.ne.s32.totalorder %s167, %s168
      %p180 = scmp.eq.s32.totalorder %s32, 1
      %p181 = por %p179, %p180
      %p183 = scmp.ne.s32.totalorder %s168, %s182
      %p184 = scmp.eq.s32.totalorder %s32, 0
      %p185 = por %p183, %p184
      %s187 = sadd.s32 %s186, 1
      %p190 = scmp.eq.s32.totalorder %s26, 1
      %p191 = scmp.ne.s32.totalorder %s186, %s188
      %p192 = scmp.eq.s32.totalorder %s26, 0
      %p193 = por %p191, %p192
      %p194 = scmp.ne.s32.totalorder %s186, %s188
      %p195 = scmp.eq.s32.totalorder %s31, 1
      %p196 = por %p194, %p195
      %p197 = scmp.ne.s32.totalorder %s188, %s189
      %p198 = scmp.eq.s32.totalorder %s31, 0
      %p199 = por %p197, %p198
      %p200 = scmp.ne.s32.totalorder %s188, %s189
      %p201 = scmp.eq.s32.totalorder %s32, 1
      %p202 = por %p200, %p201
      %p204 = scmp.ne.s32.totalorder %s189, %s203
      %p205 = scmp.eq.s32.totalorder %s32, 0
      %p206 = por %p204, %p205
      %s208 = sadd.s32 %s207, 1
      %p211 = scmp.eq.s32.totalorder %s26, 1
      %p212 = scmp.ne.s32.totalorder %s207, %s209
      %p213 = scmp.eq.s32.totalorder %s26, 0
      %p214 = por %p212, %p213
      %p215 = scmp.ne.s32.totalorder %s207, %s209
      %p216 = scmp.eq.s32.totalorder %s31, 1
      %p217 = por %p215, %p216
      %p218 = scmp.ne.s32.totalorder %s209, %s210
      %p219 = scmp.eq.s32.totalorder %s31, 0
      %p220 = por %p218, %p219
      %p221 = scmp.ne.s32.totalorder %s209, %s210
      %p222 = scmp.eq.s32.totalorder %s32, 1
      %p223 = por %p221, %p222
      %p225 = scmp.ne.s32.totalorder %s210, %s224
      %p226 = scmp.eq.s32.totalorder %s32, 0
      %p227 = por %p225, %p226
      %s229 = sadd.s32 %s228, 1
      %p232 = scmp.eq.s32.totalorder %s26, 1
      %p233 = scmp.ne.s32.totalorder %s228, %s230
      %p234 = scmp.eq.s32.totalorder %s26, 0
      %p235 = por %p233, %p234
      %p236 = scmp.ne.s32.totalorder %s228, %s230
      %p237 = scmp.eq.s32.totalorder %s31, 1
      %p238 = por %p236, %p237
      %p239 = scmp.ne.s32.totalorder %s230, %s231
      %p240 = scmp.eq.s32.totalorder %s31, 0
      %p241 = por %p239, %p240
      %p242 = scmp.ne.s32.totalorder %s230, %s231
      %p243 = scmp.eq.s32.totalorder %s32, 1
      %p244 = por %p242, %p243
      %p246 = scmp.ne.s32.totalorder %s231, %s245
      %p247 = scmp.eq.s32.totalorder %s32, 0
      %p248 = por %p246, %p247
      %s250 = sadd.s32 %s249, 1
      %p253 = scmp.eq.s32.totalorder %s26, 1
      %p254 = scmp.ne.s32.totalorder %s249, %s251
      %p255 = scmp.eq.s32.totalorder %s26, 0
      %p256 = por %p254, %p255
      %p257 = scmp.ne.s32.totalorder %s249, %s251
      %p258 = scmp.eq.s32.totalorder %s31, 1
      %p259 = por %p257, %p258
      %p260 = scmp.ne.s32.totalorder %s251, %s252
      %p261 = scmp.eq.s32.totalorder %s31, 0
      %p262 = por %p260, %p261
      %p263 = scmp.ne.s32.totalorder %s251, %s252
      %p264 = scmp.eq.s32.totalorder %s32, 1
      %p265 = por %p263, %p264
      %p267 = scmp.ne.s32.totalorder %s252, %s266
      %p268 = scmp.eq.s32.totalorder %s32, 0
      %p269 = por %p267, %p268
      %s271 = sadd.s32 %s270, 1
      %p274 = scmp.eq.s32.totalorder %s26, 1
      %p275 = scmp.ne.s32.totalorder %s270, %s272
      %p276 = scmp.eq.s32.totalorder %s26, 0
      %p277 = por %p275, %p276
      %p278 = scmp.ne.s32.totalorder %s270, %s272
      %p279 = scmp.eq.s32.totalorder %s31, 1
      %p280 = por %p278, %p279
      %p281 = scmp.ne.s32.totalorder %s272, %s273
      %p282 = scmp.eq.s32.totalorder %s31, 0
      %p283 = por %p281, %p282
      %p284 = scmp.ne.s32.totalorder %s272, %s273
      %p285 = scmp.eq.s32.totalorder %s32, 1
      %p286 = por %p284, %p285
      %p288 = scmp.ne.s32.totalorder %s273, %s287
      %p289 = scmp.eq.s32.totalorder %s32, 0
      %p290 = por %p288, %p289
      %s292 = sadd.s32 %s291, 1
      %p295 = scmp.eq.s32.totalorder %s26, 1
      %p296 = scmp.ne.s32.totalorder %s291, %s293
      %p297 = scmp.eq.s32.totalorder %s26, 0
      %p298 = por %p296, %p297
      %p299 = scmp.ne.s32.totalorder %s291, %s293
      %p300 = scmp.eq.s32.totalorder %s31, 1
      %p301 = por %p299, %p300
      %p302 = scmp.ne.s32.totalorder %s293, %s294
      %p303 = scmp.eq.s32.totalorder %s31, 0
      %p304 = por %p302, %p303
      %p305 = scmp.ne.s32.totalorder %s293, %s294
      %p306 = scmp.eq.s32.totalorder %s32, 1
      %p307 = por %p305, %p306
      %p309 = scmp.ne.s32.totalorder %s294, %s308
      %p310 = scmp.eq.s32.totalorder %s32, 0
      %p311 = por %p309, %p310
      %s312 = ssub.s32 %s26, %s33
      %p313 = scmp.eq.s32.totalorder %s312, 0
      %s315 = sadd.s32 %s314, 1
      %s316 = scalar_select %p313, %s314, %s315
      %p319 = pneg %p313
      %p320 = scmp.eq.s32.totalorder %s26, 1
      %p321 = por %p319, %p320
      %p322 = scmp.ne.s32.totalorder %s314, %s317
      %p323 = scmp.eq.s32.totalorder %s26, 0
      %p324 = por %p322, %p323
      %p325 = scmp.ne.s32.totalorder %s314, %s317
      %p326 = scmp.eq.s32.totalorder %s31, 1
      %p327 = por %p325, %p326
      %p328 = scmp.ne.s32.totalorder %s317, %s318
      %p329 = scmp.eq.s32.totalorder %s31, 0
      %p330 = por %p328, %p329
      %p331 = scmp.ne.s32.totalorder %s317, %s318
      %p332 = scmp.eq.s32.totalorder %s32, 1
      %p333 = por %p331, %p332
      %p335 = scmp.ne.s32.totalorder %s318, %s334
      %p336 = scmp.eq.s32.totalorder %s32, 0
      %p337 = por %p335, %p336
      %p338 = scmp.le.s32.totalorder 1, %s26
      %p339 = scmp.lt.s32.totalorder %s26, 3
      %p340 = pnand %p338, %p339
      %p341 = pneg %p340
      // Predicated region
      $region9: #{tpu_custom_call.1} parent=5 // pred_check
        _
      $region10: #{tpu_custom_call.1} parent=5 // pred_check_branch
        %343 = sbr.rel (%p340) target = $region12
      $region11: #{tpu_custom_call.1} parent=5 // pred_region
        %s344 = ssub.s32 %s26, 1
        // Predicated region
        $region13: #{tpu_custom_call.1} parent=11 // pred_check
          %p345 = pneg %p73
        $region14: #{tpu_custom_call.1} parent=11 // pred_check_branch
          %347 = sbr.rel (%p345) target = $region16
        $region15: #{tpu_custom_call.1} parent=11 // pred_region
          _
        $region16: #{tpu_custom_call.1} parent=11 // pred_fallthru
          _
        // Predicated region
        $region17: #{tpu_custom_call.1} parent=11 // pred_check
          %p348 = pneg %p94
        $region18: #{tpu_custom_call.1} parent=11 // pred_check_branch
          %350 = sbr.rel (%p348) target = $region20
        $region19: #{tpu_custom_call.1} parent=11 // pred_region
          _
        $region20: #{tpu_custom_call.1} parent=11 // pred_fallthru
          _
        // Predicated region
        $region21: #{tpu_custom_call.1} parent=11 // pred_check
          %p351 = pneg %p115
        $region22: #{tpu_custom_call.1} parent=11 // pred_check_branch
          %353 = sbr.rel (%p351) target = $region24
        $region23: #{tpu_custom_call.1} parent=11 // pred_region
          _
        $region24: #{tpu_custom_call.1} parent=11 // pred_fallthru
          _
        // Predicated region
        $region25: #{tpu_custom_call.1} parent=11 // pred_check
          %p354 = pneg %p136
        $region26: #{tpu_custom_call.1} parent=11 // pred_check_branch
          %356 = sbr.rel (%p354) target = $region28
        $region27: #{tpu_custom_call.1} parent=11 // pred_region
          _
        $region28: #{tpu_custom_call.1} parent=11 // pred_fallthru
          _
        // Predicated region
        $region29: #{tpu_custom_call.1} parent=11 // pred_check
          %p357 = pneg %p157
        $region30: #{tpu_custom_call.1} parent=11 // pred_check_branch
          %359 = sbr.rel (%p357) target = $region32
        $region31: #{tpu_custom_call.1} parent=11 // pred_region
          %s361 = ssub.s32 1024, 1024
          %362 = vsyncadd [#allocation6], %s361
          %s363 = sshll.u32 [#allocation5], 4
          %s364 = int_to_ptr.vmem [resolvable:$true] %s363
          %369 = dma.hbm_to_vmem [thread:$0]  %s5, 1024, %s364, [#allocation6], 128, 128, 8
        $region32: #{tpu_custom_call.1} parent=11 // pred_fallthru
          _
        // Predicated region
        $region33: #{tpu_custom_call.1} parent=11 // pred_check
          %p370 = pneg %p178
        $region34: #{tpu_custom_call.1} parent=11 // pred_check_branch
          %372 = sbr.rel (%p370) target = $region36
        $region35: #{tpu_custom_call.1} parent=11 // pred_region
          _
        $region36: #{tpu_custom_call.1} parent=11 // pred_fallthru
          _
        // Predicated region
        $region37: #{tpu_custom_call.1} parent=11 // pred_check
          %p373 = pneg %p199
        $region38: #{tpu_custom_call.1} parent=11 // pred_check_branch
          %375 = sbr.rel (%p373) target = $region40
        $region39: #{tpu_custom_call.1} parent=11 // pred_region
          _
        $region40: #{tpu_custom_call.1} parent=11 // pred_fallthru
          _
        // Predicated region
        $region41: #{tpu_custom_call.1} parent=11 // pred_check
          %p376 = pneg %p220
        $region42: #{tpu_custom_call.1} parent=11 // pred_check_branch
          %378 = sbr.rel (%p376) target = $region44
        $region43: #{tpu_custom_call.1} parent=11 // pred_region
          _
        $region44: #{tpu_custom_call.1} parent=11 // pred_fallthru
          _
        // Predicated region
        $region45: #{tpu_custom_call.1} parent=11 // pred_check
          %p379 = pneg %p241
        $region46: #{tpu_custom_call.1} parent=11 // pred_check_branch
          %381 = sbr.rel (%p379) target = $region48
        $region47: #{tpu_custom_call.1} parent=11 // pred_region
          _
        $region48: #{tpu_custom_call.1} parent=11 // pred_fallthru
          _
        // Predicated region
        $region49: #{tpu_custom_call.1} parent=11 // pred_check
          %p382 = pneg %p262
        $region50: #{tpu_custom_call.1} parent=11 // pred_check_branch
          %384 = sbr.rel (%p382) target = $region52
        $region51: #{tpu_custom_call.1} parent=11 // pred_region
          _
        $region52: #{tpu_custom_call.1} parent=11 // pred_fallthru
          _
        // Predicated region
        $region53: #{tpu_custom_call.1} parent=11 // pred_check
          %p385 = pneg %p283
        $region54: #{tpu_custom_call.1} parent=11 // pred_check_branch
          %387 = sbr.rel (%p385) target = $region56
        $region55: #{tpu_custom_call.1} parent=11 // pred_region
          _
        $region56: #{tpu_custom_call.1} parent=11 // pred_fallthru
          _
        // Predicated region
        $region57: #{tpu_custom_call.1} parent=11 // pred_check
          %p388 = pneg %p304
        $region58: #{tpu_custom_call.1} parent=11 // pred_check_branch
          %390 = sbr.rel (%p388) target = $region60
        $region59: #{tpu_custom_call.1} parent=11 // pred_region
          _
        $region60: #{tpu_custom_call.1} parent=11 // pred_fallthru
          _
      $region12: #{tpu_custom_call.1} parent=5 // pred_fallthru
        _
      %p391 = scmp.lt.s32.totalorder %s26, 2
      // Predicated region
      $region61: #{tpu_custom_call.1} parent=5 // pred_check
        %p392 = pneg %p391
      $region62: #{tpu_custom_call.1} parent=5 // pred_check_branch
        %394 = sbr.rel (%p392) target = $region64
      $region63: #{tpu_custom_call.1} parent=5 // pred_region
        // Predicated region
        $region65: #{tpu_custom_call.1} parent=63 // pred_check
          %p395 = pneg %p46
        $region66: #{tpu_custom_call.1} parent=63 // pred_check_branch
          %397 = sbr.rel (%p395) target = $region68
        $region67: #{tpu_custom_call.1} parent=63 // pred_region
          %s398 = sand.u32 %s36, 1
          %s399 = scalar_lea.sflag [#allocation3], %s398
          %s400 = sand.u32 %s36, 1
          %s401 = smul.addr %s400, 8
          %s402 = scalar_lea.vmem [#allocation2], %s401
          %s404 = ssub.s32 128, 128
          %405 = vsyncadd %s399, %s404
          %s406 = smul.addr %s26, 128
          %s407 = scalar_lea.hbm %s0, %s406
          %s409 = sshll.u32 %s402, 4
          %s410 = int_to_ptr.vmem [resolvable:$true] %s409
          %412 = dma.hbm_to_vmem [thread:$0]  %s407, 128, %s410, %s399
        $region68: #{tpu_custom_call.1} parent=63 // pred_fallthru
          _
      $region64: #{tpu_custom_call.1} parent=5 // pred_fallthru
        _
      %p413 = scmp.le.s32.totalorder 1, %s26
      %p414 = scmp.lt.s32.totalorder %s26, 3
      %p415 = pnand %p413, %p414
      %p416 = pneg %p415
      // Predicated region
      $region69: #{tpu_custom_call.1} parent=5 // pred_check
        _
      $region70: #{tpu_custom_call.1} parent=5 // pred_check_branch
        %418 = sbr.rel (%p415) target = $region72
      $region71: #{tpu_custom_call.1} parent=5 // pred_region
        %s419 = ssub.s32 %s26, 1
        %s420 = sand.u32 %s39, 1
        %s421 = scalar_lea.sflag [#allocation3], %s420
        %s422 = sand.u32 %s39, 1
        %s423 = smul.addr %s422, 8
        %s424 = scalar_lea.vmem [#allocation2], %s423
        // Predicated region
        $region73: #{tpu_custom_call.1} parent=71 // pred_check
          %p425 = pneg %p52
        $region74: #{tpu_custom_call.1} parent=71 // pred_check_branch
          %427 = sbr.rel (%p425) target = $region76
        $region75: #{tpu_custom_call.1} parent=71 // pred_region
          %428 = dma.done %s421, 128
        $region76: #{tpu_custom_call.1} parent=71 // pred_fallthru
          _
        // Predicated region
        $region77: #{tpu_custom_call.1} parent=71 // pred_check
          %p429 = pneg %p157
        $region78: #{tpu_custom_call.1} parent=71 // pred_check_branch
          %431 = sbr.rel (%p429) target = $region80
        $region79: #{tpu_custom_call.1} parent=71 // pred_region
          %432 = dma.done [#allocation6], 1024
        $region80: #{tpu_custom_call.1} parent=71 // pred_fallthru
          _
        %s433 = sand.u32 %s39, 1
        %s434 = scalar_lea.sflag [#allocation3], %s433
        %s435 = sand.u32 %s39, 1
        %s436 = smul.addr %s435, 8
        %s437 = scalar_lea.vmem [#allocation2], %s436
        %p438 = pneg %p52
        %p439 = pneg %p49
        %p440 = pneg %p73
        %p441 = pneg %p70
        %p442 = pneg %p94
        %p443 = pneg %p91
        %p444 = pneg %p115
        %p445 = pneg %p112
        %p446 = pneg %p136
        %p447 = pneg %p133
        %p448 = pneg %p157
        %p449 = pneg %p154
        %p450 = pneg %p178
        %p451 = pneg %p175
        %p452 = pneg %p199
        %p453 = pneg %p196
        %p454 = pneg %p220
        %p455 = pneg %p217
        %p456 = pneg %p241
        %p457 = pneg %p238
        %p458 = pneg %p262
        %p459 = pneg %p259
        %p460 = pneg %p283
        %p461 = pneg %p280
        %p462 = pneg %p304
        %p463 = pneg %p301
        %p464 = pneg %p330
        %p465 = pneg %p327
        %s466 = sand.u32 %s317, 1
        %s467 = scalar_lea.sflag [#allocation4], %s466
        %s468 = sand.u32 %s317, 1
        %s469 = smul.addr %s468, 8
        %s470 = scalar_lea.vmem [#allocation7], %s469
        %v471 = vld [vmem:[%s424] sm:$0xff]
        %v472 = vld [vmem:[%s1] sm:$0xff]
        %v473 = vld [vmem:[%s1 + $0x8] sm:$0xff]
        %v474 = vld [vmem:[%s1 + $0x10] sm:$0xff]
        %v475 = vld [vmem:[%s1 + $0x18] sm:$0xff]
        %v476 = vld [vmem:[%s1 + $0x20] sm:$0xff]
        %v477 = vld [vmem:[%s1 + $0x28] sm:$0xff]
        %v478 = vld [vmem:[%s1 + $0x30] sm:$0xff]
        %v479 = vld [vmem:[%s1 + $0x38] sm:$0xff]
        %v480 = vld [vmem:[%s1 + $0x40] sm:$0xff]
        %v481 = vld [vmem:[%s1 + $0x48] sm:$0xff]
        %v482 = vld [vmem:[%s1 + $0x50] sm:$0xff]
        %v483 = vld [vmem:[%s1 + $0x58] sm:$0xff]
        %v484 = vld [vmem:[%s1 + $0x60] sm:$0xff]
        %v485 = vld [vmem:[%s1 + $0x68] sm:$0xff]
        %v486 = vld [vmem:[%s1 + $0x70] sm:$0xff]
        %v487 = vld [vmem:[%s1 + $0x78] sm:$0xff]
        %v488 = vld [vmem:[%s2] sm:$0x3]
        %v490 = vlaneseq
        %v491 = vshrl.u32 %v490, 7
        %v492 = vsub.s32 0, %v491
        %v493 = vrot.slane %v488, %v492
        %v494 = vlaneseq
        %v495 = vshrl.u32 %v494, 7
        %v496 = vsub.s32 1, %v495
        %v497 = vrot.slane %v488, %v496
        %vm500 = vcmask 523264
        %v502 = vsel %vm500, %v471, 0
        %504 = vmatprep.subr.mxu0 %v473
        %505 = vmatpush1.msra.mxu0 %v472
        %506 = vmatprep.subr.mxu0 %v475
        %507 = vmatpush1.msra.mxu0 %v474
        %508 = vmatprep.subr.mxu0 %v477
        %509 = vmatpush1.msra.mxu0 %v476
        %510 = vmatprep.subr.mxu0 %v479
        %511 = vmatpush1.msra.mxu0 %v478
        %512 = vmatprep.subr.mxu0 %v481
        %513 = vmatpush1.msra.mxu0 %v480
        %514 = vmatprep.subr.mxu0 %v483
        %515 = vmatpush1.msra.mxu0 %v482
        %516 = vmatprep.subr.mxu0 %v485
        %517 = vmatpush1.msra.mxu0 %v484
        %518 = vmatprep.subr.mxu0 %v487
        %519 = vmatpush1.msra.mxu0 %v486
        %520 = vmatprep.subr.mxu0 0.0
        %521 = vmatpush1.msra.mxu0 0.0
        %522 = vmatprep.subr.mxu0 0.0
        %523 = vmatpush1.msra.mxu0 0.0
        %524 = vmatprep.subr.mxu0 0.0
        %525 = vmatpush1.msra.mxu0 0.0
        %526 = vmatprep.subr.mxu0 0.0
        %527 = vmatpush1.msra.mxu0 0.0
        %528 = vmatprep.subr.mxu0 0.0
        %529 = vmatpush1.msra.mxu0 0.0
        %530 = vmatprep.subr.mxu0 0.0
        %531 = vmatpush1.msra.mxu0 0.0
        %532 = vmatprep.subr.mxu0 0.0
        %533 = vmatpush1.msra.mxu0 0.0
        %534 = vmatprep.subr.mxu0 0.0
        %535 = vmatpush1.msra.mxu0 0.0
        %536 = vmatprep.subr.mxu0 0.0
        %537 = vmatpush1.msra.mxu0 0.0
        %538 = vmatprep.subr.mxu0 0.0
        %539 = vmatpush1.msra.mxu0 0.0
        %540 = vmatprep.subr.mxu0 0.0
        %541 = vmatpush1.msra.mxu0 0.0
        %542 = vmatprep.subr.mxu0 0.0
        %543 = vmatpush1.msra.mxu0 0.0
        %544 = vmatprep.subr.mxu0 0.0
        %545 = vmatpush1.msra.mxu0 0.0
        %546 = vmatprep.subr.mxu0 0.0
        %547 = vmatpush1.msra.mxu0 0.0
        %548 = vmatprep.subr.mxu0 0.0
        %549 = vmatpush1.msra.mxu0 0.0
        %550 = vmatprep.subr.mxu0 0.0
        %551 = vmatpush1.msra.mxu0 0.0
        %552 = vmatprep.subr.mxu0 0.0
        %553 = vmatpush1.msra.mxu0 0.0
        %554 = vmatprep.subr.mxu0 0.0
        %555 = vmatpush1.msra.mxu0 0.0
        %556 = vmatprep.subr.mxu0 0.0
        %557 = vmatpush1.msra.mxu0 0.0
        %558 = vmatprep.subr.mxu0 0.0
        %559 = vmatpush1.msra.mxu0 0.0
        %560 = vmatprep.subr.mxu0 0.0
        %561 = vmatpush1.msra.mxu0 0.0
        %562 = vmatprep.subr.mxu0 0.0
        %563 = vmatpush1.msra.mxu0 0.0
        %564 = vmatprep.subr.mxu0 0.0
        %565 = vmatpush1.msra.mxu0 0.0
        %566 = vmatprep.subr.mxu0 0.0
        %567 = vmatpush1.msra.mxu0 0.0
        %568 = vmatprep.mubr.f32.mxu0 0.0
        %569 = vmatmul.mubr.f32.gmra.mrb[0].mxu0 %v502
        %v570 = vpop.f32.mrb[0].mxu0
        %v571 = vadd.f32 %v493, %v570
        %v572 = vpop.f32.mrb[0].mxu0
        %v573 = vadd.f32 %v497, %v572
        %574 = vdwg.mxu0
        %576 = vrot.lane.b32.xlu0 %v571, 120
        %v577 = vpop.permute.xlu0 %576
        %579 = vrot.lane.b32.xlu0 %v571, 112
        %v580 = vpop.permute.xlu0 %579
        %582 = vrot.lane.b32.xlu0 %v571, 104
        %v583 = vpop.permute.xlu0 %582
        %585 = vrot.lane.b32.xlu0 %v571, 96
        %v586 = vpop.permute.xlu0 %585
        %588 = vrot.lane.b32.xlu0 %v571, 88
        %v589 = vpop.permute.xlu0 %588
        %591 = vrot.lane.b32.xlu0 %v571, 80
        %v592 = vpop.permute.xlu0 %591
        %594 = vrot.lane.b32.xlu0 %v571, 72
        %v595 = vpop.permute.xlu0 %594
        %v597 = vmul.f32 %v571, 0.35355338
        %v598 = vmul.f32 %v577, 0.35355338
        %v599 = vmul.f32 %v580, 0.35355338
        %v600 = vmul.f32 %v583, 0.35355338
        %v601 = vmul.f32 %v586, 0.35355338
        %v602 = vmul.f32 %v589, 0.35355338
        %v603 = vmul.f32 %v592, 0.35355338
        %v604 = vmul.f32 %v595, 0.35355338
        %606 = vrot.lane.b32.xlu0 %v573, 120
        %v607 = vpop.permute.xlu0 %606
        %609 = vrot.lane.b32.xlu0 %v573, 112
        %v610 = vpop.permute.xlu0 %609
        %612 = vrot.lane.b32.xlu0 %v573, 104
        %v613 = vpop.permute.xlu0 %612
        %615 = vrot.lane.b32.xlu0 %v573, 96
        %v616 = vpop.permute.xlu0 %615
        %618 = vrot.lane.b32.xlu0 %v573, 88
        %v619 = vpop.permute.xlu0 %618
        %621 = vrot.lane.b32.xlu0 %v573, 80
        %v622 = vpop.permute.xlu0 %621
        %624 = vrot.lane.b32.xlu0 %v573, 72
        %v625 = vpop.permute.xlu0 %624
        %627 = vrot.lane.b32.xlu0 %v571, 64
        %v628 = vpop.permute.xlu0 %627
        %vm629 = vcmask 64512
        %v631 = vsel %vm629, %v597, 0
        %v633 = vsel %vm629, %v628, 0
        %635 = vmatprep.subr.mxu0 0.0
        %636 = vmatpush1.xpose.msra.mxu0 %v633
        %637 = vmatprep.subr.mxu0 0.0
        %638 = vmatpush1.xpose.msra.mxu0 0.0
        %639 = vmatprep.subr.mxu0 0.0
        %640 = vmatpush1.xpose.msra.mxu0 0.0
        %641 = vmatprep.subr.mxu0 0.0
        %642 = vmatpush1.xpose.msra.mxu0 0.0
        %643 = vmatprep.subr.mxu0 0.0
        %644 = vmatpush1.xpose.msra.mxu0 0.0
        %645 = vmatprep.subr.mxu0 0.0
        %646 = vmatpush1.xpose.msra.mxu0 0.0
        %647 = vmatprep.subr.mxu0 0.0
        %648 = vmatpush1.xpose.msra.mxu0 0.0
        %649 = vmatprep.subr.mxu0 0.0
        %650 = vmatpush1.xpose.msra.mxu0 0.0
        %651 = vmatprep.subr.mxu0 0.0
        %652 = vmatpush1.xpose.msra.mxu0 0.0
        %653 = vmatprep.subr.mxu0 0.0
        %654 = vmatpush1.xpose.msra.mxu0 0.0
        %655 = vmatprep.subr.mxu0 0.0
        %656 = vmatpush1.xpose.msra.mxu0 0.0
        %657 = vmatprep.subr.mxu0 0.0
        %658 = vmatpush1.xpose.msra.mxu0 0.0
        %659 = vmatprep.subr.mxu0 0.0
        %660 = vmatpush1.xpose.msra.mxu0 0.0
        %661 = vmatprep.subr.mxu0 0.0
        %662 = vmatpush1.xpose.msra.mxu0 0.0
        %663 = vmatprep.subr.mxu0 0.0
        %664 = vmatpush1.xpose.msra.mxu0 0.0
        %665 = vmatprep.subr.mxu0 0.0
        %666 = vmatpush1.xpose.msra.mxu0 0.0
        %667 = vmatprep.subr.mxu0 0.0
        %668 = vmatpush1.xpose.msra.mxu0 0.0
        %669 = vmatprep.subr.mxu0 0.0
        %670 = vmatpush1.xpose.msra.mxu0 0.0
        %671 = vmatprep.subr.mxu0 0.0
        %672 = vmatpush1.xpose.msra.mxu0 0.0
        %673 = vmatprep.subr.mxu0 0.0
        %674 = vmatpush1.xpose.msra.mxu0 0.0
        %675 = vmatprep.subr.mxu0 0.0
        %676 = vmatpush1.xpose.msra.mxu0 0.0
        %677 = vmatprep.subr.mxu0 0.0
        %678 = vmatpush1.xpose.msra.mxu0 0.0
        %679 = vmatprep.subr.mxu0 0.0
        %680 = vmatpush1.xpose.msra.mxu0 0.0
        %681 = vmatprep.subr.mxu0 0.0
        %682 = vmatpush1.xpose.msra.mxu0 0.0
        %683 = vmatprep.subr.mxu0 0.0
        %684 = vmatpush1.xpose.msra.mxu0 0.0
        %685 = vmatprep.subr.mxu0 0.0
        %686 = vmatpush1.xpose.msra.mxu0 0.0
        %687 = vmatprep.subr.mxu0 0.0
        %688 = vmatpush1.xpose.msra.mxu0 0.0
        %689 = vmatprep.subr.mxu0 0.0
        %690 = vmatpush1.xpose.msra.mxu0 0.0
        %691 = vmatprep.subr.mxu0 0.0
        %692 = vmatpush1.xpose.msra.mxu0 0.0
        %693 = vmatprep.subr.mxu0 0.0
        %694 = vmatpush1.xpose.msra.mxu0 0.0
        %695 = vmatprep.subr.mxu0 0.0
        %696 = vmatpush1.xpose.msra.mxu0 0.0
        %697 = vmatprep.subr.mxu0 0.0
        %698 = vmatpush1.xpose.msra.mxu0 0.0
        %699 = vmatprep.mubr.f32.mxu0 0.0
        %700 = vmatmul.mubr.f32.gmra.mrb[0].mxu0 %v631
        %v701 = vpop.f32.mrb[0].mxu0
        %v702 = vadd.f32 0.0, %v701
        %v703 = vpop.f32.mrb[0].mxu0
        %704 = vdwg.mxu0
        %705 = vrot.lane.b32.xlu0 %v577, 64
        %v706 = vpop.permute.xlu0 %705
        %v708 = vsel %vm629, %v598, 0
        %v710 = vsel %vm629, %v706, 0
        %712 = vmatprep.subr.mxu0 0.0
        %713 = vmatpush1.xpose.msra.mxu0 %v710
        %714 = vmatprep.subr.mxu0 0.0
        %715 = vmatpush1.xpose.msra.mxu0 0.0
        %716 = vmatprep.subr.mxu0 0.0
        %717 = vmatpush1.xpose.msra.mxu0 0.0
        %718 = vmatprep.subr.mxu0 0.0
        %719 = vmatpush1.xpose.msra.mxu0 0.0
        %720 = vmatprep.subr.mxu0 0.0
        %721 = vmatpush1.xpose.msra.mxu0 0.0
        %722 = vmatprep.subr.mxu0 0.0
        %723 = vmatpush1.xpose.msra.mxu0 0.0
        %724 = vmatprep.subr.mxu0 0.0
        %725 = vmatpush1.xpose.msra.mxu0 0.0
        %726 = vmatprep.subr.mxu0 0.0
        %727 = vmatpush1.xpose.msra.mxu0 0.0
        %728 = vmatprep.subr.mxu0 0.0
        %729 = vmatpush1.xpose.msra.mxu0 0.0
        %730 = vmatprep.subr.mxu0 0.0
        %731 = vmatpush1.xpose.msra.mxu0 0.0
        %732 = vmatprep.subr.mxu0 0.0
        %733 = vmatpush1.xpose.msra.mxu0 0.0
        %734 = vmatprep.subr.mxu0 0.0
        %735 = vmatpush1.xpose.msra.mxu0 0.0
        %736 = vmatprep.subr.mxu0 0.0
        %737 = vmatpush1.xpose.msra.mxu0 0.0
        %738 = vmatprep.subr.mxu0 0.0
        %739 = vmatpush1.xpose.msra.mxu0 0.0
        %740 = vmatprep.subr.mxu0 0.0
        %741 = vmatpush1.xpose.msra.mxu0 0.0
        %742 = vmatprep.subr.mxu0 0.0
        %743 = vmatpush1.xpose.msra.mxu0 0.0
        %744 = vmatprep.subr.mxu0 0.0
        %745 = vmatpush1.xpose.msra.mxu0 0.0
        %746 = vmatprep.subr.mxu0 0.0
        %747 = vmatpush1.xpose.msra.mxu0 0.0
        %748 = vmatprep.subr.mxu0 0.0
        %749 = vmatpush1.xpose.msra.mxu0 0.0
        %750 = vmatprep.subr.mxu0 0.0
        %751 = vmatpush1.xpose.msra.mxu0 0.0
        %752 = vmatprep.subr.mxu0 0.0
        %753 = vmatpush1.xpose.msra.mxu0 0.0
        %754 = vmatprep.subr.mxu0 0.0
        %755 = vmatpush1.xpose.msra.mxu0 0.0
        %756 = vmatprep.subr.mxu0 0.0
        %757 = vmatpush1.xpose.msra.mxu0 0.0
        %758 = vmatprep.subr.mxu0 0.0
        %759 = vmatpush1.xpose.msra.mxu0 0.0
        %760 = vmatprep.subr.mxu0 0.0
        %761 = vmatpush1.xpose.msra.mxu0 0.0
        %762 = vmatprep.subr.mxu0 0.0
        %763 = vmatpush1.xpose.msra.mxu0 0.0
        %764 = vmatprep.subr.mxu0 0.0
        %765 = vmatpush1.xpose.msra.mxu0 0.0
        %766 = vmatprep.subr.mxu0 0.0
        %767 = vmatpush1.xpose.msra.mxu0 0.0
        %768 = vmatprep.subr.mxu0 0.0
        %769 = vmatpush1.xpose.msra.mxu0 0.0
        %770 = vmatprep.subr.mxu0 0.0
        %771 = vmatpush1.xpose.msra.mxu0 0.0
        %772 = vmatprep.subr.mxu0 0.0
        %773 = vmatpush1.xpose.msra.mxu0 0.0
        %774 = vmatprep.subr.mxu0 0.0
        %775 = vmatpush1.xpose.msra.mxu0 0.0
        %776 = vmatprep.mubr.f32.mxu0 0.0
        %777 = vmatmul.mubr.f32.gmra.mrb[0].mxu0 %v708
        %v778 = vpop.f32.mrb[0].mxu0
        %v779 = vadd.f32 0.0, %v778
        %v780 = vpop.f32.mrb[0].mxu0
        %781 = vdwg.mxu0
        %782 = vrot.lane.b32.xlu0 %v580, 64
        %v783 = vpop.permute.xlu0 %782
        %v785 = vsel %vm629, %v599, 0
        %v787 = vsel %vm629, %v783, 0
        %789 = vmatprep.subr.mxu0 0.0
        %790 = vmatpush1.xpose.msra.mxu0 %v787
        %791 = vmatprep.subr.mxu0 0.0
        %792 = vmatpush1.xpose.msra.mxu0 0.0
        %793 = vmatprep.subr.mxu0 0.0
        %794 = vmatpush1.xpose.msra.mxu0 0.0
        %795 = vmatprep.subr.mxu0 0.0
        %796 = vmatpush1.xpose.msra.mxu0 0.0
        %797 = vmatprep.subr.mxu0 0.0
        %798 = vmatpush1.xpose.msra.mxu0 0.0
        %799 = vmatprep.subr.mxu0 0.0
        %800 = vmatpush1.xpose.msra.mxu0 0.0
        %801 = vmatprep.subr.mxu0 0.0
        %802 = vmatpush1.xpose.msra.mxu0 0.0
        %803 = vmatprep.subr.mxu0 0.0
        %804 = vmatpush1.xpose.msra.mxu0 0.0
        %805 = vmatprep.subr.mxu0 0.0
        %806 = vmatpush1.xpose.msra.mxu0 0.0
        %807 = vmatprep.subr.mxu0 0.0
        %808 = vmatpush1.xpose.msra.mxu0 0.0
        %809 = vmatprep.subr.mxu0 0.0
        %810 = vmatpush1.xpose.msra.mxu0 0.0
        %811 = vmatprep.subr.mxu0 0.0
        %812 = vmatpush1.xpose.msra.mxu0 0.0
        %813 = vmatprep.subr.mxu0 0.0
        %814 = vmatpush1.xpose.msra.mxu0 0.0
        %815 = vmatprep.subr.mxu0 0.0
        %816 = vmatpush1.xpose.msra.mxu0 0.0
        %817 = vmatprep.subr.mxu0 0.0
        %818 = vmatpush1.xpose.msra.mxu0 0.0
        %819 = vmatprep.subr.mxu0 0.0
        %820 = vmatpush1.xpose.msra.mxu0 0.0
        %821 = vmatprep.subr.mxu0 0.0
        %822 = vmatpush1.xpose.msra.mxu0 0.0
        %823 = vmatprep.subr.mxu0 0.0
        %824 = vmatpush1.xpose.msra.mxu0 0.0
        %825 = vmatprep.subr.mxu0 0.0
        %826 = vmatpush1.xpose.msra.mxu0 0.0
        %827 = vmatprep.subr.mxu0 0.0
        %828 = vmatpush1.xpose.msra.mxu0 0.0
        %829 = vmatprep.subr.mxu0 0.0
        %830 = vmatpush1.xpose.msra.mxu0 0.0
        %831 = vmatprep.subr.mxu0 0.0
        %832 = vmatpush1.xpose.msra.mxu0 0.0
        %833 = vmatprep.subr.mxu0 0.0
        %834 = vmatpush1.xpose.msra.mxu0 0.0
        %835 = vmatprep.subr.mxu0 0.0
        %836 = vmatpush1.xpose.msra.mxu0 0.0
        %837 = vmatprep.subr.mxu0 0.0
        %838 = vmatpush1.xpose.msra.mxu0 0.0
        %839 = vmatprep.subr.mxu0 0.0
        %840 = vmatpush1.xpose.msra.mxu0 0.0
        %841 = vmatprep.subr.mxu0 0.0
        %842 = vmatpush1.xpose.msra.mxu0 0.0
        %843 = vmatprep.subr.mxu0 0.0
        %844 = vmatpush1.xpose.msra.mxu0 0.0
        %845 = vmatprep.subr.mxu0 0.0
        %846 = vmatpush1.xpose.msra.mxu0 0.0
        %847 = vmatprep.subr.mxu0 0.0
        %848 = vmatpush1.xpose.msra.mxu0 0.0
        %849 = vmatprep.subr.mxu0 0.0
        %850 = vmatpush1.xpose.msra.mxu0 0.0
        %851 = vmatprep.subr.mxu0 0.0
        %852 = vmatpush1.xpose.msra.mxu0 0.0
        %853 = vmatprep.mubr.f32.mxu0 0.0
        %854 = vmatmul.mubr.f32.gmra.mrb[0].mxu0 %v785
        %v855 = vpop.f32.mrb[0].mxu0
        %v856 = vadd.f32 0.0, %v855
        %v857 = vpop.f32.mrb[0].mxu0
        %858 = vdwg.mxu0
        %859 = vrot.lane.b32.xlu0 %v583, 64
        %v860 = vpop.permute.xlu0 %859
        %v862 = vsel %vm629, %v600, 0
        %v864 = vsel %vm629, %v860, 0
        %866 = vmatprep.subr.mxu0 0.0
        %867 = vmatpush1.xpose.msra.mxu0 %v864
        %868 = vmatprep.subr.mxu0 0.0
        %869 = vmatpush1.xpose.msra.mxu0 0.0
        %870 = vmatprep.subr.mxu0 0.0
        %871 = vmatpush1.xpose.msra.mxu0 0.0
        %872 = vmatprep.subr.mxu0 0.0
        %873 = vmatpush1.xpose.msra.mxu0 0.0
        %874 = vmatprep.subr.mxu0 0.0
        %875 = vmatpush1.xpose.msra.mxu0 0.0
        %876 = vmatprep.subr.mxu0 0.0
        %877 = vmatpush1.xpose.msra.mxu0 0.0
        %878 = vmatprep.subr.mxu0 0.0
        %879 = vmatpush1.xpose.msra.mxu0 0.0
        %880 = vmatprep.subr.mxu0 0.0
        %881 = vmatpush1.xpose.msra.mxu0 0.0
        %882 = vmatprep.subr.mxu0 0.0
        %883 = vmatpush1.xpose.msra.mxu0 0.0
        %884 = vmatprep.subr.mxu0 0.0
        %885 = vmatpush1.xpose.msra.mxu0 0.0
        %886 = vmatprep.subr.mxu0 0.0
        %887 = vmatpush1.xpose.msra.mxu0 0.0
        %888 = vmatprep.subr.mxu0 0.0
        %889 = vmatpush1.xpose.msra.mxu0 0.0
        %890 = vmatprep.subr.mxu0 0.0
        %891 = vmatpush1.xpose.msra.mxu0 0.0
        %892 = vmatprep.subr.mxu0 0.0
        %893 = vmatpush1.xpose.msra.mxu0 0.0
        %894 = vmatprep.subr.mxu0 0.0
        %895 = vmatpush1.xpose.msra.mxu0 0.0
        %896 = vmatprep.subr.mxu0 0.0
        %897 = vmatpush1.xpose.msra.mxu0 0.0
        %898 = vmatprep.subr.mxu0 0.0
        %899 = vmatpush1.xpose.msra.mxu0 0.0
        %900 = vmatprep.subr.mxu0 0.0
        %901 = vmatpush1.xpose.msra.mxu0 0.0
        %902 = vmatprep.subr.mxu0 0.0
        %903 = vmatpush1.xpose.msra.mxu0 0.0
        %904 = vmatprep.subr.mxu0 0.0
        %905 = vmatpush1.xpose.msra.mxu0 0.0
        %906 = vmatprep.subr.mxu0 0.0
        %907 = vmatpush1.xpose.msra.mxu0 0.0
        %908 = vmatprep.subr.mxu0 0.0
        %909 = vmatpush1.xpose.msra.mxu0 0.0
        %910 = vmatprep.subr.mxu0 0.0
        %911 = vmatpush1.xpose.msra.mxu0 0.0
        %912 = vmatprep.subr.mxu0 0.0
        %913 = vmatpush1.xpose.msra.mxu0 0.0
        %914 = vmatprep.subr.mxu0 0.0
        %915 = vmatpush1.xpose.msra.mxu0 0.0
        %916 = vmatprep.subr.mxu0 0.0
        %917 = vmatpush1.xpose.msra.mxu0 0.0
        %918 = vmatprep.subr.mxu0 0.0
        %919 = vmatpush1.xpose.msra.mxu0 0.0
        %920 = vmatprep.subr.mxu0 0.0
        %921 = vmatpush1.xpose.msra.mxu0 0.0
        %922 = vmatprep.subr.mxu0 0.0
        %923 = vmatpush1.xpose.msra.mxu0 0.0
        %924 = vmatprep.subr.mxu0 0.0
        %925 = vmatpush1.xpose.msra.mxu0 0.0
        %926 = vmatprep.subr.mxu0 0.0
        %927 = vmatpush1.xpose.msra.mxu0 0.0
        %928 = vmatprep.subr.mxu0 0.0
        %929 = vmatpush1.xpose.msra.mxu0 0.0
        %930 = vmatprep.mubr.f32.mxu0 0.0
        %931 = vmatmul.mubr.f32.gmra.mrb[0].mxu0 %v862
        %v932 = vpop.f32.mrb[0].mxu0
        %v933 = vadd.f32 0.0, %v932
        %v934 = vpop.f32.mrb[0].mxu0
        %935 = vdwg.mxu0
        %936 = vrot.lane.b32.xlu0 %v586, 64
        %v937 = vpop.permute.xlu0 %936
        %v939 = vsel %vm629, %v601, 0
        %v941 = vsel %vm629, %v937, 0
        %943 = vmatprep.subr.mxu0 0.0
        %944 = vmatpush1.xpose.msra.mxu0 %v941
        %945 = vmatprep.subr.mxu0 0.0
        %946 = vmatpush1.xpose.msra.mxu0 0.0
        %947 = vmatprep.subr.mxu0 0.0
        %948 = vmatpush1.xpose.msra.mxu0 0.0
        %949 = vmatprep.subr.mxu0 0.0
        %950 = vmatpush1.xpose.msra.mxu0 0.0
        %951 = vmatprep.subr.mxu0 0.0
        %952 = vmatpush1.xpose.msra.mxu0 0.0
        %953 = vmatprep.subr.mxu0 0.0
        %954 = vmatpush1.xpose.msra.mxu0 0.0
        %955 = vmatprep.subr.mxu0 0.0
        %956 = vmatpush1.xpose.msra.mxu0 0.0
        %957 = vmatprep.subr.mxu0 0.0
        %958 = vmatpush1.xpose.msra.mxu0 0.0
        %959 = vmatprep.subr.mxu0 0.0
        %960 = vmatpush1.xpose.msra.mxu0 0.0
        %961 = vmatprep.subr.mxu0 0.0
        %962 = vmatpush1.xpose.msra.mxu0 0.0
        %963 = vmatprep.subr.mxu0 0.0
        %964 = vmatpush1.xpose.msra.mxu0 0.0
        %965 = vmatprep.subr.mxu0 0.0
        %966 = vmatpush1.xpose.msra.mxu0 0.0
        %967 = vmatprep.subr.mxu0 0.0
        %968 = vmatpush1.xpose.msra.mxu0 0.0
        %969 = vmatprep.subr.mxu0 0.0
        %970 = vmatpush1.xpose.msra.mxu0 0.0
        %971 = vmatprep.subr.mxu0 0.0
        %972 = vmatpush1.xpose.msra.mxu0 0.0
        %973 = vmatprep.subr.mxu0 0.0
        %974 = vmatpush1.xpose.msra.mxu0 0.0
        %975 = vmatprep.subr.mxu0 0.0
        %976 = vmatpush1.xpose.msra.mxu0 0.0
        %977 = vmatprep.subr.mxu0 0.0
        %978 = vmatpush1.xpose.msra.mxu0 0.0
        %979 = vmatprep.subr.mxu0 0.0
        %980 = vmatpush1.xpose.msra.mxu0 0.0
        %981 = vmatprep.subr.mxu0 0.0
        %982 = vmatpush1.xpose.msra.mxu0 0.0
        %983 = vmatprep.subr.mxu0 0.0
        %984 = vmatpush1.xpose.msra.mxu0 0.0
        %985 = vmatprep.subr.mxu0 0.0
        %986 = vmatpush1.xpose.msra.mxu0 0.0
        %987 = vmatprep.subr.mxu0 0.0
        %988 = vmatpush1.xpose.msra.mxu0 0.0
        %989 = vmatprep.subr.mxu0 0.0
        %990 = vmatpush1.xpose.msra.mxu0 0.0
        %991 = vmatprep.subr.mxu0 0.0
        %992 = vmatpush1.xpose.msra.mxu0 0.0
        %993 = vmatprep.subr.mxu0 0.0
        %994 = vmatpush1.xpose.msra.mxu0 0.0
        %995 = vmatprep.subr.mxu0 0.0
        %996 = vmatpush1.xpose.msra.mxu0 0.0
        %997 = vmatprep.subr.mxu0 0.0
        %998 = vmatpush1.xpose.msra.mxu0 0.0
        %999 = vmatprep.subr.mxu0 0.0
        %1000 = vmatpush1.xpose.msra.mxu0 0.0
        %1001 = vmatprep.subr.mxu0 0.0
        %1002 = vmatpush1.xpose.msra.mxu0 0.0
        %1003 = vmatprep.subr.mxu0 0.0
        %1004 = vmatpush1.xpose.msra.mxu0 0.0
        %1005 = vmatprep.subr.mxu0 0.0
        %1006 = vmatpush1.xpose.msra.mxu0 0.0
        %1007 = vmatprep.mubr.f32.mxu0 0.0
        %1008 = vmatmul.mubr.f32.gmra.mrb[0].mxu0 %v939
        %v1009 = vpop.f32.mrb[0].mxu0
        %v1010 = vadd.f32 0.0, %v1009
        %v1011 = vpop.f32.mrb[0].mxu0
        %1012 = vdwg.mxu0
        %1013 = vrot.lane.b32.xlu0 %v589, 64
        %v1014 = vpop.permute.xlu0 %1013
        %v1016 = vsel %vm629, %v602, 0
        %v1018 = vsel %vm629, %v1014, 0
        %1020 = vmatprep.subr.mxu0 0.0
        %1021 = vmatpush1.xpose.msra.mxu0 %v1018
        %1022 = vmatprep.subr.mxu0 0.0
        %1023 = vmatpush1.xpose.msra.mxu0 0.0
        %1024 = vmatprep.subr.mxu0 0.0
        %1025 = vmatpush1.xpose.msra.mxu0 0.0
        %1026 = vmatprep.subr.mxu0 0.0
        %1027 = vmatpush1.xpose.msra.mxu0 0.0
        %1028 = vmatprep.subr.mxu0 0.0
        %1029 = vmatpush1.xpose.msra.mxu0 0.0
        %1030 = vmatprep.subr.mxu0 0.0
        %1031 = vmatpush1.xpose.msra.mxu0 0.0
        %1032 = vmatprep.subr.mxu0 0.0
        %1033 = vmatpush1.xpose.msra.mxu0 0.0
        %1034 = vmatprep.subr.mxu0 0.0
        %1035 = vmatpush1.xpose.msra.mxu0 0.0
        %1036 = vmatprep.subr.mxu0 0.0
        %1037 = vmatpush1.xpose.msra.mxu0 0.0
        %1038 = vmatprep.subr.mxu0 0.0
        %1039 = vmatpush1.xpose.msra.mxu0 0.0
        %1040 = vmatprep.subr.mxu0 0.0
        %1041 = vmatpush1.xpose.msra.mxu0 0.0
        %1042 = vmatprep.subr.mxu0 0.0
        %1043 = vmatpush1.xpose.msra.mxu0 0.0
        %1044 = vmatprep.subr.mxu0 0.0
        %1045 = vmatpush1.xpose.msra.mxu0 0.0
        %1046 = vmatprep.subr.mxu0 0.0
        %1047 = vmatpush1.xpose.msra.mxu0 0.0
        %1048 = vmatprep.subr.mxu0 0.0
        %1049 = vmatpush1.xpose.msra.mxu0 0.0
        %1050 = vmatprep.subr.mxu0 0.0
        %1051 = vmatpush1.xpose.msra.mxu0 0.0
        %1052 = vmatprep.subr.mxu0 0.0
        %1053 = vmatpush1.xpose.msra.mxu0 0.0
        %1054 = vmatprep.subr.mxu0 0.0
        %1055 = vmatpush1.xpose.msra.mxu0 0.0
        %1056 = vmatprep.subr.mxu0 0.0
        %1057 = vmatpush1.xpose.msra.mxu0 0.0
        %1058 = vmatprep.subr.mxu0 0.0
        %1059 = vmatpush1.xpose.msra.mxu0 0.0
        %1060 = vmatprep.subr.mxu0 0.0
        %1061 = vmatpush1.xpose.msra.mxu0 0.0
        %1062 = vmatprep.subr.mxu0 0.0
        %1063 = vmatpush1.xpose.msra.mxu0 0.0
        %1064 = vmatprep.subr.mxu0 0.0
        %1065 = vmatpush1.xpose.msra.mxu0 0.0
        %1066 = vmatprep.subr.mxu0 0.0
        %1067 = vmatpush1.xpose.msra.mxu0 0.0
        %1068 = vmatprep.subr.mxu0 0.0
        %1069 = vmatpush1.xpose.msra.mxu0 0.0
        %1070 = vmatprep.subr.mxu0 0.0
        %1071 = vmatpush1.xpose.msra.mxu0 0.0
        %1072 = vmatprep.subr.mxu0 0.0
        %1073 = vmatpush1.xpose.msra.mxu0 0.0
        %1074 = vmatprep.subr.mxu0 0.0
        %1075 = vmatpush1.xpose.msra.mxu0 0.0
        %1076 = vmatprep.subr.mxu0 0.0
        %1077 = vmatpush1.xpose.msra.mxu0 0.0
        %1078 = vmatprep.subr.mxu0 0.0
        %1079 = vmatpush1.xpose.msra.mxu0 0.0
        %1080 = vmatprep.subr.mxu0 0.0
        %1081 = vmatpush1.xpose.msra.mxu0 0.0
        %1082 = vmatprep.subr.mxu0 0.0
        %1083 = vmatpush1.xpose.msra.mxu0 0.0
        %1084 = vmatprep.mubr.f32.mxu0 0.0
        %1085 = vmatmul.mubr.f32.gmra.mrb[0].mxu0 %v1016
        %v1086 = vpop.f32.mrb[0].mxu0
        %v1087 = vadd.f32 0.0, %v1086
        %v1088 = vpop.f32.mrb[0].mxu0
        %1089 = vdwg.mxu0
        %1090 = vrot.lane.b32.xlu0 %v592, 64
        %v1091 = vpop.permute.xlu0 %1090
        %v1093 = vsel %vm629, %v603, 0
        %v1095 = vsel %vm629, %v1091, 0
        %1097 = vmatprep.subr.mxu0 0.0
        %1098 = vmatpush1.xpose.msra.mxu0 %v1095
        %1099 = vmatprep.subr.mxu0 0.0
        %1100 = vmatpush1.xpose.msra.mxu0 0.0
        %1101 = vmatprep.subr.mxu0 0.0
        %1102 = vmatpush1.xpose.msra.mxu0 0.0
        %1103 = vmatprep.subr.mxu0 0.0
        %1104 = vmatpush1.xpose.msra.mxu0 0.0
        %1105 = vmatprep.subr.mxu0 0.0
        %1106 = vmatpush1.xpose.msra.mxu0 0.0
        %1107 = vmatprep.subr.mxu0 0.0
        %1108 = vmatpush1.xpose.msra.mxu0 0.0
        %1109 = vmatprep.subr.mxu0 0.0
        %1110 = vmatpush1.xpose.msra.mxu0 0.0
        %1111 = vmatprep.subr.mxu0 0.0
        %1112 = vmatpush1.xpose.msra.mxu0 0.0
        %1113 = vmatprep.subr.mxu0 0.0
        %1114 = vmatpush1.xpose.msra.mxu0 0.0
        %1115 = vmatprep.subr.mxu0 0.0
        %1116 = vmatpush1.xpose.msra.mxu0 0.0
        %1117 = vmatprep.subr.mxu0 0.0
        %1118 = vmatpush1.xpose.msra.mxu0 0.0
        %1119 = vmatprep.subr.mxu0 0.0
        %1120 = vmatpush1.xpose.msra.mxu0 0.0
        %1121 = vmatprep.subr.mxu0 0.0
        %1122 = vmatpush1.xpose.msra.mxu0 0.0
        %1123 = vmatprep.subr.mxu0 0.0
        %1124 = vmatpush1.xpose.msra.mxu0 0.0
        %1125 = vmatprep.subr.mxu0 0.0
        %1126 = vmatpush1.xpose.msra.mxu0 0.0
        %1127 = vmatprep.subr.mxu0 0.0
        %1128 = vmatpush1.xpose.msra.mxu0 0.0
        %1129 = vmatprep.subr.mxu0 0.0
        %1130 = vmatpush1.xpose.msra.mxu0 0.0
        %1131 = vmatprep.subr.mxu0 0.0
        %1132 = vmatpush1.xpose.msra.mxu0 0.0
        %1133 = vmatprep.subr.mxu0 0.0
        %1134 = vmatpush1.xpose.msra.mxu0 0.0
        %1135 = vmatprep.subr.mxu0 0.0
        %1136 = vmatpush1.xpose.msra.mxu0 0.0
        %1137 = vmatprep.subr.mxu0 0.0
        %1138 = vmatpush1.xpose.msra.mxu0 0.0
        %1139 = vmatprep.subr.mxu0 0.0
        %1140 = vmatpush1.xpose.msra.mxu0 0.0
        %1141 = vmatprep.subr.mxu0 0.0
        %1142 = vmatpush1.xpose.msra.mxu0 0.0
        %1143 = vmatprep.subr.mxu0 0.0
        %1144 = vmatpush1.xpose.msra.mxu0 0.0
        %1145 = vmatprep.subr.mxu0 0.0
        %1146 = vmatpush1.xpose.msra.mxu0 0.0
        %1147 = vmatprep.subr.mxu0 0.0
        %1148 = vmatpush1.xpose.msra.mxu0 0.0
        %1149 = vmatprep.subr.mxu0 0.0
        %1150 = vmatpush1.xpose.msra.mxu0 0.0
        %1151 = vmatprep.subr.mxu0 0.0
        %1152 = vmatpush1.xpose.msra.mxu0 0.0
        %1153 = vmatprep.subr.mxu0 0.0
        %1154 = vmatpush1.xpose.msra.mxu0 0.0
        %1155 = vmatprep.subr.mxu0 0.0
        %1156 = vmatpush1.xpose.msra.mxu0 0.0
        %1157 = vmatprep.subr.mxu0 0.0
        %1158 = vmatpush1.xpose.msra.mxu0 0.0
        %1159 = vmatprep.subr.mxu0 0.0
        %1160 = vmatpush1.xpose.msra.mxu0 0.0
        %1161 = vmatprep.mubr.f32.mxu0 0.0
        %1162 = vmatmul.mubr.f32.gmra.mrb[0].mxu0 %v1093
        %v1163 = vpop.f32.mrb[0].mxu0
        %v1164 = vadd.f32 0.0, %v1163
        %v1165 = vpop.f32.mrb[0].mxu0
        %1166 = vdwg.mxu0
        %1167 = vrot.lane.b32.xlu0 %v595, 64
        %v1168 = vpop.permute.xlu0 %1167
        %v1170 = vsel %vm629, %v604, 0
        %v1172 = vsel %vm629, %v1168, 0
        %1174 = vmatprep.subr.mxu0 0.0
        %1175 = vmatpush1.xpose.msra.mxu0 %v1172
        %1176 = vmatprep.subr.mxu0 0.0
        %1177 = vmatpush1.xpose.msra.mxu0 0.0
        %1178 = vmatprep.subr.mxu0 0.0
        %1179 = vmatpush1.xpose.msra.mxu0 0.0
        %1180 = vmatprep.subr.mxu0 0.0
        %1181 = vmatpush1.xpose.msra.mxu0 0.0
        %1182 = vmatprep.subr.mxu0 0.0
        %1183 = vmatpush1.xpose.msra.mxu0 0.0
        %1184 = vmatprep.subr.mxu0 0.0
        %1185 = vmatpush1.xpose.msra.mxu0 0.0
        %1186 = vmatprep.subr.mxu0 0.0
        %1187 = vmatpush1.xpose.msra.mxu0 0.0
        %1188 = vmatprep.subr.mxu0 0.0
        %1189 = vmatpush1.xpose.msra.mxu0 0.0
        %1190 = vmatprep.subr.mxu0 0.0
        %1191 = vmatpush1.xpose.msra.mxu0 0.0
        %1192 = vmatprep.subr.mxu0 0.0
        %1193 = vmatpush1.xpose.msra.mxu0 0.0
        %1194 = vmatprep.subr.mxu0 0.0
        %1195 = vmatpush1.xpose.msra.mxu0 0.0
        %1196 = vmatprep.subr.mxu0 0.0
        %1197 = vmatpush1.xpose.msra.mxu0 0.0
        %1198 = vmatprep.subr.mxu0 0.0
        %1199 = vmatpush1.xpose.msra.mxu0 0.0
        %1200 = vmatprep.subr.mxu0 0.0
        %1201 = vmatpush1.xpose.msra.mxu0 0.0
        %1202 = vmatprep.subr.mxu0 0.0
        %1203 = vmatpush1.xpose.msra.mxu0 0.0
        %1204 = vmatprep.subr.mxu0 0.0
        %1205 = vmatpush1.xpose.msra.mxu0 0.0
        %1206 = vmatprep.subr.mxu0 0.0
        %1207 = vmatpush1.xpose.msra.mxu0 0.0
        %1208 = vmatprep.subr.mxu0 0.0
        %1209 = vmatpush1.xpose.msra.mxu0 0.0
        %1210 = vmatprep.subr.mxu0 0.0
        %1211 = vmatpush1.xpose.msra.mxu0 0.0
        %1212 = vmatprep.subr.mxu0 0.0
        %1213 = vmatpush1.xpose.msra.mxu0 0.0
        %1214 = vmatprep.subr.mxu0 0.0
        %1215 = vmatpush1.xpose.msra.mxu0 0.0
        %1216 = vmatprep.subr.mxu0 0.0
        %1217 = vmatpush1.xpose.msra.mxu0 0.0
        %1218 = vmatprep.subr.mxu0 0.0
        %1219 = vmatpush1.xpose.msra.mxu0 0.0
        %1220 = vmatprep.subr.mxu0 0.0
        %1221 = vmatpush1.xpose.msra.mxu0 0.0
        %1222 = vmatprep.subr.mxu0 0.0
        %1223 = vmatpush1.xpose.msra.mxu0 0.0
        %1224 = vmatprep.subr.mxu0 0.0
        %1225 = vmatpush1.xpose.msra.mxu0 0.0
        %1226 = vmatprep.subr.mxu0 0.0
        %1227 = vmatpush1.xpose.msra.mxu0 0.0
        %1228 = vmatprep.subr.mxu0 0.0
        %1229 = vmatpush1.xpose.msra.mxu0 0.0
        %1230 = vmatprep.subr.mxu0 0.0
        %1231 = vmatpush1.xpose.msra.mxu0 0.0
        %1232 = vmatprep.subr.mxu0 0.0
        %1233 = vmatpush1.xpose.msra.mxu0 0.0
        %1234 = vmatprep.subr.mxu0 0.0
        %1235 = vmatpush1.xpose.msra.mxu0 0.0
        %1236 = vmatprep.subr.mxu0 0.0
        %1237 = vmatpush1.xpose.msra.mxu0 0.0
        %1238 = vmatprep.mubr.f32.mxu0 0.0
        %1239 = vmatmul.mubr.f32.gmra.mrb[0].mxu0 %v1170
        %v1240 = vpop.f32.mrb[0].mxu0
        %v1241 = vadd.f32 0.0, %v1240
        %v1242 = vpop.f32.mrb[0].mxu0
        %1243 = vdwg.mxu0
        %v1244 = vsel %vm629, %v702, -inf
        %1245 = vmax.xlane.f32.xlu0 %v1244
        %v1246 = vpop.xlane.xlu0 %1245
        %v1247 = vsel %vm629, %v779, -inf
        %1248 = vmax.xlane.f32.xlu0 %v1247
        %v1249 = vpop.xlane.xlu0 %1248
        %v1250 = vsel %vm629, %v856, -inf
        %1251 = vmax.xlane.f32.xlu0 %v1250
        %v1252 = vpop.xlane.xlu0 %1251
        %v1253 = vsel %vm629, %v933, -inf
        %1254 = vmax.xlane.f32.xlu0 %v1253
        %v1255 = vpop.xlane.xlu0 %1254
        %v1256 = vsel %vm629, %v1010, -inf
        %1257 = vmax.xlane.f32.xlu0 %v1256
        %v1258 = vpop.xlane.xlu0 %1257
        %v1259 = vsel %vm629, %v1087, -inf
        %1260 = vmax.xlane.f32.xlu0 %v1259
        %v1261 = vpop.xlane.xlu0 %1260
        %v1262 = vsel %vm629, %v1164, -inf
        %1263 = vmax.xlane.f32.xlu0 %v1262
        %v1264 = vpop.xlane.xlu0 %1263
        %v1265 = vsel %vm629, %v1241, -inf
        %1266 = vmax.xlane.f32.xlu0 %v1265
        %v1267 = vpop.xlane.xlu0 %1266
        %v1268 = vsub.f32 %v702, %v1246
        %v1269 = vsub.f32 %v779, %v1249
        %v1270 = vsub.f32 %v856, %v1252
        %v1271 = vsub.f32 %v933, %v1255
        %v1272 = vsub.f32 %v1010, %v1258
        %v1273 = vsub.f32 %v1087, %v1261
        %v1274 = vsub.f32 %v1164, %v1264
        %v1275 = vsub.f32 %v1241, %v1267
        %v1276 = vmul.f32 %v1268, 1.442695
        %v1277 = vpow.pop %v1276
        %v1278 = vmul.f32 %v1269, 1.442695
        %v1279 = vpow.pop %v1278
        %v1280 = vmul.f32 %v1270, 1.442695
        %v1281 = vpow.pop %v1280
        %v1282 = vmul.f32 %v1271, 1.442695
        %v1283 = vpow.pop %v1282
        %v1284 = vmul.f32 %v1272, 1.442695
        %v1285 = vpow.pop %v1284
        %v1286 = vmul.f32 %v1273, 1.442695
        %v1287 = vpow.pop %v1286
        %v1288 = vmul.f32 %v1274, 1.442695
        %v1289 = vpow.pop %v1288
        %v1290 = vmul.f32 %v1275, 1.442695
        %v1291 = vpow.pop %v1290
        %v1292 = vsel %vm629, %v1277, 0.0
        %1293 = vadd.xlane.f32.xlu0 %v1292
        %v1294 = vpop.xlane.xlu0 %1293
        %v1295 = vsel %vm629, %v1279, 0.0
        %1296 = vadd.xlane.f32.xlu0 %v1295
        %v1297 = vpop.xlane.xlu0 %1296
        %v1298 = vsel %vm629, %v1281, 0.0
        %1299 = vadd.xlane.f32.xlu0 %v1298
        %v1300 = vpop.xlane.xlu0 %1299
        %v1301 = vsel %vm629, %v1283, 0.0
        %1302 = vadd.xlane.f32.xlu0 %v1301
        %v1303 = vpop.xlane.xlu0 %1302
        %v1304 = vsel %vm629, %v1285, 0.0
        %1305 = vadd.xlane.f32.xlu0 %v1304
        %v1306 = vpop.xlane.xlu0 %1305
        %v1307 = vsel %vm629, %v1287, 0.0
        %1308 = vadd.xlane.f32.xlu0 %v1307
        %v1309 = vpop.xlane.xlu0 %1308
        %v1310 = vsel %vm629, %v1289, 0.0
        %1311 = vadd.xlane.f32.xlu0 %v1310
        %v1312 = vpop.xlane.xlu0 %1311
        %v1313 = vsel %vm629, %v1291, 0.0
        %1314 = vadd.xlane.f32.xlu0 %v1313
        %v1315 = vpop.xlane.xlu0 %1314
        %v1316 = vrcp.pop %v1294
        %v1317 = vrcp.pop %v1297
        %v1318 = vrcp.pop %v1300
        %v1319 = vrcp.pop %v1303
        %v1320 = vrcp.pop %v1306
        %v1321 = vrcp.pop %v1309
        %v1322 = vrcp.pop %v1312
        %v1323 = vrcp.pop %v1315
        %v1324 = vmul.f32 %v1277, %v1316
        %v1325 = vmul.f32 %v1279, %v1317
        %v1326 = vmul.f32 %v1281, %v1318
        %v1327 = vmul.f32 %v1283, %v1319
        %v1328 = vmul.f32 %v1285, %v1320
        %v1329 = vmul.f32 %v1287, %v1321
        %v1330 = vmul.f32 %v1289, %v1322
        %v1331 = vmul.f32 %v1291, %v1323
        %v1333 = vsel %vm629, %v1324, 0
        %1335 = vmatprep.subr.mxu0 0.0
        %1336 = vmatpush1.msra.mxu0 %v573
        %1337 = vmatprep.subr.mxu0 0.0
        %1338 = vmatpush1.msra.mxu0 0.0
        %1339 = vmatprep.subr.mxu0 0.0
        %1340 = vmatpush1.msra.mxu0 0.0
        %1341 = vmatprep.subr.mxu0 0.0
        %1342 = vmatpush1.msra.mxu0 0.0
        %1343 = vmatprep.subr.mxu0 0.0
        %1344 = vmatpush1.msra.mxu0 0.0
        %1345 = vmatprep.subr.mxu0 0.0
        %1346 = vmatpush1.msra.mxu0 0.0
        %1347 = vmatprep.subr.mxu0 0.0
        %1348 = vmatpush1.msra.mxu0 0.0
        %1349 = vmatprep.subr.mxu0 0.0
        %1350 = vmatpush1.msra.mxu0 0.0
        %1351 = vmatprep.subr.mxu0 0.0
        %1352 = vmatpush1.msra.mxu0 0.0
        %1353 = vmatprep.subr.mxu0 0.0
        %1354 = vmatpush1.msra.mxu0 0.0
        %1355 = vmatprep.subr.mxu0 0.0
        %1356 = vmatpush1.msra.mxu0 0.0
        %1357 = vmatprep.subr.mxu0 0.0
        %1358 = vmatpush1.msra.mxu0 0.0
        %1359 = vmatprep.subr.mxu0 0.0
        %1360 = vmatpush1.msra.mxu0 0.0
        %1361 = vmatprep.subr.mxu0 0.0
        %1362 = vmatpush1.msra.mxu0 0.0
        %1363 = vmatprep.subr.mxu0 0.0
        %1364 = vmatpush1.msra.mxu0 0.0
        %1365 = vmatprep.subr.mxu0 0.0
        %1366 = vmatpush1.msra.mxu0 0.0
        %1367 = vmatprep.subr.mxu0 0.0
        %1368 = vmatpush1.msra.mxu0 0.0
        %1369 = vmatprep.subr.mxu0 0.0
        %1370 = vmatpush1.msra.mxu0 0.0
        %1371 = vmatprep.subr.mxu0 0.0
        %1372 = vmatpush1.msra.mxu0 0.0
        %1373 = vmatprep.subr.mxu0 0.0
        %1374 = vmatpush1.msra.mxu0 0.0
        %1375 = vmatprep.subr.mxu0 0.0
        %1376 = vmatpush1.msra.mxu0 0.0
        %1377 = vmatprep.subr.mxu0 0.0
        %1378 = vmatpush1.msra.mxu0 0.0
        %1379 = vmatprep.subr.mxu0 0.0
        %1380 = vmatpush1.msra.mxu0 0.0
        %1381 = vmatprep.subr.mxu0 0.0
        %1382 = vmatpush1.msra.mxu0 0.0
        %1383 = vmatprep.subr.mxu0 0.0
        %1384 = vmatpush1.msra.mxu0 0.0
        %1385 = vmatprep.subr.mxu0 0.0
        %1386 = vmatpush1.msra.mxu0 0.0
        %1387 = vmatprep.subr.mxu0 0.0
        %1388 = vmatpush1.msra.mxu0 0.0
        %1389 = vmatprep.subr.mxu0 0.0
        %1390 = vmatpush1.msra.mxu0 0.0
        %1391 = vmatprep.subr.mxu0 0.0
        %1392 = vmatpush1.msra.mxu0 0.0
        %1393 = vmatprep.subr.mxu0 0.0
        %1394 = vmatpush1.msra.mxu0 0.0
        %1395 = vmatprep.subr.mxu0 0.0
        %1396 = vmatpush1.msra.mxu0 0.0
        %1397 = vmatprep.subr.mxu0 0.0
        %1398 = vmatpush1.msra.mxu0 0.0
        %1399 = vmatprep.mubr.f32.mxu0 0.0
        %1400 = vmatmul.mubr.f32.gmra.mrb[0].mxu0 %v1333
        %v1401 = vpop.f32.mrb[0].mxu0
        %v1402 = vadd.f32 0.0, %v1401
        %v1403 = vpop.f32.mrb[0].mxu0
        %1404 = vdwg.mxu0
        %v1406 = vsel %vm629, %v1325, 0
        %1408 = vmatprep.subr.mxu0 0.0
        %1409 = vmatpush1.msra.mxu0 %v607
        %1410 = vmatprep.subr.mxu0 0.0
        %1411 = vmatpush1.msra.mxu0 0.0
        %1412 = vmatprep.subr.mxu0 0.0
        %1413 = vmatpush1.msra.mxu0 0.0
        %1414 = vmatprep.subr.mxu0 0.0
        %1415 = vmatpush1.msra.mxu0 0.0
        %1416 = vmatprep.subr.mxu0 0.0
        %1417 = vmatpush1.msra.mxu0 0.0
        %1418 = vmatprep.subr.mxu0 0.0
        %1419 = vmatpush1.msra.mxu0 0.0
        %1420 = vmatprep.subr.mxu0 0.0
        %1421 = vmatpush1.msra.mxu0 0.0
        %1422 = vmatprep.subr.mxu0 0.0
        %1423 = vmatpush1.msra.mxu0 0.0
        %1424 = vmatprep.subr.mxu0 0.0
        %1425 = vmatpush1.msra.mxu0 0.0
        %1426 = vmatprep.subr.mxu0 0.0
        %1427 = vmatpush1.msra.mxu0 0.0
        %1428 = vmatprep.subr.mxu0 0.0
        %1429 = vmatpush1.msra.mxu0 0.0
        %1430 = vmatprep.subr.mxu0 0.0
        %1431 = vmatpush1.msra.mxu0 0.0
        %1432 = vmatprep.subr.mxu0 0.0
        %1433 = vmatpush1.msra.mxu0 0.0
        %1434 = vmatprep.subr.mxu0 0.0
        %1435 = vmatpush1.msra.mxu0 0.0
        %1436 = vmatprep.subr.mxu0 0.0
        %1437 = vmatpush1.msra.mxu0 0.0
        %1438 = vmatprep.subr.mxu0 0.0
        %1439 = vmatpush1.msra.mxu0 0.0
        %1440 = vmatprep.subr.mxu0 0.0
        %1441 = vmatpush1.msra.mxu0 0.0
        %1442 = vmatprep.subr.mxu0 0.0
        %1443 = vmatpush1.msra.mxu0 0.0
        %1444 = vmatprep.subr.mxu0 0.0
        %1445 = vmatpush1.msra.mxu0 0.0
        %1446 = vmatprep.subr.mxu0 0.0
        %1447 = vmatpush1.msra.mxu0 0.0
        %1448 = vmatprep.subr.mxu0 0.0
        %1449 = vmatpush1.msra.mxu0 0.0
        %1450 = vmatprep.subr.mxu0 0.0
        %1451 = vmatpush1.msra.mxu0 0.0
        %1452 = vmatprep.subr.mxu0 0.0
        %1453 = vmatpush1.msra.mxu0 0.0
        %1454 = vmatprep.subr.mxu0 0.0
        %1455 = vmatpush1.msra.mxu0 0.0
        %1456 = vmatprep.subr.mxu0 0.0
        %1457 = vmatpush1.msra.mxu0 0.0
        %1458 = vmatprep.subr.mxu0 0.0
        %1459 = vmatpush1.msra.mxu0 0.0
        %1460 = vmatprep.subr.mxu0 0.0
        %1461 = vmatpush1.msra.mxu0 0.0
        %1462 = vmatprep.subr.mxu0 0.0
        %1463 = vmatpush1.msra.mxu0 0.0
        %1464 = vmatprep.subr.mxu0 0.0
        %1465 = vmatpush1.msra.mxu0 0.0
        %1466 = vmatprep.subr.mxu0 0.0
        %1467 = vmatpush1.msra.mxu0 0.0
        %1468 = vmatprep.subr.mxu0 0.0
        %1469 = vmatpush1.msra.mxu0 0.0
        %1470 = vmatprep.subr.mxu0 0.0
        %1471 = vmatpush1.msra.mxu0 0.0
        %1472 = vmatprep.mubr.f32.mxu0 0.0
        %1473 = vmatmul.mubr.f32.gmra.mrb[0].mxu0 %v1406
        %v1474 = vpop.f32.mrb[0].mxu0
        %v1475 = vadd.f32 0.0, %v1474
        %v1476 = vpop.f32.mrb[0].mxu0
        %1477 = vdwg.mxu0
        %v1479 = vsel %vm629, %v1326, 0
        %1481 = vmatprep.subr.mxu0 0.0
        %1482 = vmatpush1.msra.mxu0 %v610
        %1483 = vmatprep.subr.mxu0 0.0
        %1484 = vmatpush1.msra.mxu0 0.0
        %1485 = vmatprep.subr.mxu0 0.0
        %1486 = vmatpush1.msra.mxu0 0.0
        %1487 = vmatprep.subr.mxu0 0.0
        %1488 = vmatpush1.msra.mxu0 0.0
        %1489 = vmatprep.subr.mxu0 0.0
        %1490 = vmatpush1.msra.mxu0 0.0
        %1491 = vmatprep.subr.mxu0 0.0
        %1492 = vmatpush1.msra.mxu0 0.0
        %1493 = vmatprep.subr.mxu0 0.0
        %1494 = vmatpush1.msra.mxu0 0.0
        %1495 = vmatprep.subr.mxu0 0.0
        %1496 = vmatpush1.msra.mxu0 0.0
        %1497 = vmatprep.subr.mxu0 0.0
        %1498 = vmatpush1.msra.mxu0 0.0
        %1499 = vmatprep.subr.mxu0 0.0
        %1500 = vmatpush1.msra.mxu0 0.0
        %1501 = vmatprep.subr.mxu0 0.0
        %1502 = vmatpush1.msra.mxu0 0.0
        %1503 = vmatprep.subr.mxu0 0.0
        %1504 = vmatpush1.msra.mxu0 0.0
        %1505 = vmatprep.subr.mxu0 0.0
        %1506 = vmatpush1.msra.mxu0 0.0
        %1507 = vmatprep.subr.mxu0 0.0
        %1508 = vmatpush1.msra.mxu0 0.0
        %1509 = vmatprep.subr.mxu0 0.0
        %1510 = vmatpush1.msra.mxu0 0.0
        %1511 = vmatprep.subr.mxu0 0.0
        %1512 = vmatpush1.msra.mxu0 0.0
        %1513 = vmatprep.subr.mxu0 0.0
        %1514 = vmatpush1.msra.mxu0 0.0
        %1515 = vmatprep.subr.mxu0 0.0
        %1516 = vmatpush1.msra.mxu0 0.0
        %1517 = vmatprep.subr.mxu0 0.0
        %1518 = vmatpush1.msra.mxu0 0.0
        %1519 = vmatprep.subr.mxu0 0.0
        %1520 = vmatpush1.msra.mxu0 0.0
        %1521 = vmatprep.subr.mxu0 0.0
        %1522 = vmatpush1.msra.mxu0 0.0
        %1523 = vmatprep.subr.mxu0 0.0
        %1524 = vmatpush1.msra.mxu0 0.0
        %1525 = vmatprep.subr.mxu0 0.0
        %1526 = vmatpush1.msra.mxu0 0.0
        %1527 = vmatprep.subr.mxu0 0.0
        %1528 = vmatpush1.msra.mxu0 0.0
        %1529 = vmatprep.subr.mxu0 0.0
        %1530 = vmatpush1.msra.mxu0 0.0
        %1531 = vmatprep.subr.mxu0 0.0
        %1532 = vmatpush1.msra.mxu0 0.0
        %1533 = vmatprep.subr.mxu0 0.0
        %1534 = vmatpush1.msra.mxu0 0.0
        %1535 = vmatprep.subr.mxu0 0.0
        %1536 = vmatpush1.msra.mxu0 0.0
        %1537 = vmatprep.subr.mxu0 0.0
        %1538 = vmatpush1.msra.mxu0 0.0
        %1539 = vmatprep.subr.mxu0 0.0
        %1540 = vmatpush1.msra.mxu0 0.0
        %1541 = vmatprep.subr.mxu0 0.0
        %1542 = vmatpush1.msra.mxu0 0.0
        %1543 = vmatprep.subr.mxu0 0.0
        %1544 = vmatpush1.msra.mxu0 0.0
        %1545 = vmatprep.mubr.f32.mxu0 0.0
        %1546 = vmatmul.mubr.f32.gmra.mrb[0].mxu0 %v1479
        %v1547 = vpop.f32.mrb[0].mxu0
        %v1548 = vadd.f32 0.0, %v1547
        %v1549 = vpop.f32.mrb[0].mxu0
        %1550 = vdwg.mxu0
        %v1552 = vsel %vm629, %v1327, 0
        %1554 = vmatprep.subr.mxu0 0.0
        %1555 = vmatpush1.msra.mxu0 %v613
        %1556 = vmatprep.subr.mxu0 0.0
        %1557 = vmatpush1.msra.mxu0 0.0
        %1558 = vmatprep.subr.mxu0 0.0
        %1559 = vmatpush1.msra.mxu0 0.0
        %1560 = vmatprep.subr.mxu0 0.0
        %1561 = vmatpush1.msra.mxu0 0.0
        %1562 = vmatprep.subr.mxu0 0.0
        %1563 = vmatpush1.msra.mxu0 0.0
        %1564 = vmatprep.subr.mxu0 0.0
        %1565 = vmatpush1.msra.mxu0 0.0
        %1566 = vmatprep.subr.mxu0 0.0
        %1567 = vmatpush1.msra.mxu0 0.0
        %1568 = vmatprep.subr.mxu0 0.0
        %1569 = vmatpush1.msra.mxu0 0.0
        %1570 = vmatprep.subr.mxu0 0.0
        %1571 = vmatpush1.msra.mxu0 0.0
        %1572 = vmatprep.subr.mxu0 0.0
        %1573 = vmatpush1.msra.mxu0 0.0
        %1574 = vmatprep.subr.mxu0 0.0
        %1575 = vmatpush1.msra.mxu0 0.0
        %1576 = vmatprep.subr.mxu0 0.0
        %1577 = vmatpush1.msra.mxu0 0.0
        %1578 = vmatprep.subr.mxu0 0.0
        %1579 = vmatpush1.msra.mxu0 0.0
        %1580 = vmatprep.subr.mxu0 0.0
        %1581 = vmatpush1.msra.mxu0 0.0
        %1582 = vmatprep.subr.mxu0 0.0
        %1583 = vmatpush1.msra.mxu0 0.0
        %1584 = vmatprep.subr.mxu0 0.0
        %1585 = vmatpush1.msra.mxu0 0.0
        %1586 = vmatprep.subr.mxu0 0.0
        %1587 = vmatpush1.msra.mxu0 0.0
        %1588 = vmatprep.subr.mxu0 0.0
        %1589 = vmatpush1.msra.mxu0 0.0
        %1590 = vmatprep.subr.mxu0 0.0
        %1591 = vmatpush1.msra.mxu0 0.0
        %1592 = vmatprep.subr.mxu0 0.0
        %1593 = vmatpush1.msra.mxu0 0.0
        %1594 = vmatprep.subr.mxu0 0.0
        %1595 = vmatpush1.msra.mxu0 0.0
        %1596 = vmatprep.subr.mxu0 0.0
        %1597 = vmatpush1.msra.mxu0 0.0
        %1598 = vmatprep.subr.mxu0 0.0
        %1599 = vmatpush1.msra.mxu0 0.0
        %1600 = vmatprep.subr.mxu0 0.0
        %1601 = vmatpush1.msra.mxu0 0.0
        %1602 = vmatprep.subr.mxu0 0.0
        %1603 = vmatpush1.msra.mxu0 0.0
        %1604 = vmatprep.subr.mxu0 0.0
        %1605 = vmatpush1.msra.mxu0 0.0
        %1606 = vmatprep.subr.mxu0 0.0
        %1607 = vmatpush1.msra.mxu0 0.0
        %1608 = vmatprep.subr.mxu0 0.0
        %1609 = vmatpush1.msra.mxu0 0.0
        %1610 = vmatprep.subr.mxu0 0.0
        %1611 = vmatpush1.msra.mxu0 0.0
        %1612 = vmatprep.subr.mxu0 0.0
        %1613 = vmatpush1.msra.mxu0 0.0
        %1614 = vmatprep.subr.mxu0 0.0
        %1615 = vmatpush1.msra.mxu0 0.0
        %1616 = vmatprep.subr.mxu0 0.0
        %1617 = vmatpush1.msra.mxu0 0.0
        %1618 = vmatprep.mubr.f32.mxu0 0.0
        %1619 = vmatmul.mubr.f32.gmra.mrb[0].mxu0 %v1552
        %v1620 = vpop.f32.mrb[0].mxu0
        %v1621 = vadd.f32 0.0, %v1620
        %v1622 = vpop.f32.mrb[0].mxu0
        %1623 = vdwg.mxu0
        %v1625 = vsel %vm629, %v1328, 0
        %1627 = vmatprep.subr.mxu0 0.0
        %1628 = vmatpush1.msra.mxu0 %v616
        %1629 = vmatprep.subr.mxu0 0.0
        %1630 = vmatpush1.msra.mxu0 0.0
        %1631 = vmatprep.subr.mxu0 0.0
        %1632 = vmatpush1.msra.mxu0 0.0
        %1633 = vmatprep.subr.mxu0 0.0
        %1634 = vmatpush1.msra.mxu0 0.0
        %1635 = vmatprep.subr.mxu0 0.0
        %1636 = vmatpush1.msra.mxu0 0.0
        %1637 = vmatprep.subr.mxu0 0.0
        %1638 = vmatpush1.msra.mxu0 0.0
        %1639 = vmatprep.subr.mxu0 0.0
        %1640 = vmatpush1.msra.mxu0 0.0
        %1641 = vmatprep.subr.mxu0 0.0
        %1642 = vmatpush1.msra.mxu0 0.0
        %1643 = vmatprep.subr.mxu0 0.0
        %1644 = vmatpush1.msra.mxu0 0.0
        %1645 = vmatprep.subr.mxu0 0.0
        %1646 = vmatpush1.msra.mxu0 0.0
        %1647 = vmatprep.subr.mxu0 0.0
        %1648 = vmatpush1.msra.mxu0 0.0
        %1649 = vmatprep.subr.mxu0 0.0
        %1650 = vmatpush1.msra.mxu0 0.0
        %1651 = vmatprep.subr.mxu0 0.0
        %1652 = vmatpush1.msra.mxu0 0.0
        %1653 = vmatprep.subr.mxu0 0.0
        %1654 = vmatpush1.msra.mxu0 0.0
        %1655 = vmatprep.subr.mxu0 0.0
        %1656 = vmatpush1.msra.mxu0 0.0
        %1657 = vmatprep.subr.mxu0 0.0
        %1658 = vmatpush1.msra.mxu0 0.0
        %1659 = vmatprep.subr.mxu0 0.0
        %1660 = vmatpush1.msra.mxu0 0.0
        %1661 = vmatprep.subr.mxu0 0.0
        %1662 = vmatpush1.msra.mxu0 0.0
        %1663 = vmatprep.subr.mxu0 0.0
        %1664 = vmatpush1.msra.mxu0 0.0
        %1665 = vmatprep.subr.mxu0 0.0
        %1666 = vmatpush1.msra.mxu0 0.0
        %1667 = vmatprep.subr.mxu0 0.0
        %1668 = vmatpush1.msra.mxu0 0.0
        %1669 = vmatprep.subr.mxu0 0.0
        %1670 = vmatpush1.msra.mxu0 0.0
        %1671 = vmatprep.subr.mxu0 0.0
        %1672 = vmatpush1.msra.mxu0 0.0
        %1673 = vmatprep.subr.mxu0 0.0
        %1674 = vmatpush1.msra.mxu0 0.0
        %1675 = vmatprep.subr.mxu0 0.0
        %1676 = vmatpush1.msra.mxu0 0.0
        %1677 = vmatprep.subr.mxu0 0.0
        %1678 = vmatpush1.msra.mxu0 0.0
        %1679 = vmatprep.subr.mxu0 0.0
        %1680 = vmatpush1.msra.mxu0 0.0
        %1681 = vmatprep.subr.mxu0 0.0
        %1682 = vmatpush1.msra.mxu0 0.0
        %1683 = vmatprep.subr.mxu0 0.0
        %1684 = vmatpush1.msra.mxu0 0.0
        %1685 = vmatprep.subr.mxu0 0.0
        %1686 = vmatpush1.msra.mxu0 0.0
        %1687 = vmatprep.subr.mxu0 0.0
        %1688 = vmatpush1.msra.mxu0 0.0
        %1689 = vmatprep.subr.mxu0 0.0
        %1690 = vmatpush1.msra.mxu0 0.0
        %1691 = vmatprep.mubr.f32.mxu0 0.0
        %1692 = vmatmul.mubr.f32.gmra.mrb[0].mxu0 %v1625
        %v1693 = vpop.f32.mrb[0].mxu0
        %v1694 = vadd.f32 0.0, %v1693
        %v1695 = vpop.f32.mrb[0].mxu0
        %1696 = vdwg.mxu0
        %v1698 = vsel %vm629, %v1329, 0
        %1700 = vmatprep.subr.mxu0 0.0
        %1701 = vmatpush1.msra.mxu0 %v619
        %1702 = vmatprep.subr.mxu0 0.0
        %1703 = vmatpush1.msra.mxu0 0.0
        %1704 = vmatprep.subr.mxu0 0.0
        %1705 = vmatpush1.msra.mxu0 0.0
        %1706 = vmatprep.subr.mxu0 0.0
        %1707 = vmatpush1.msra.mxu0 0.0
        %1708 = vmatprep.subr.mxu0 0.0
        %1709 = vmatpush1.msra.mxu0 0.0
        %1710 = vmatprep.subr.mxu0 0.0
        %1711 = vmatpush1.msra.mxu0 0.0
        %1712 = vmatprep.subr.mxu0 0.0
        %1713 = vmatpush1.msra.mxu0 0.0
        %1714 = vmatprep.subr.mxu0 0.0
        %1715 = vmatpush1.msra.mxu0 0.0
        %1716 = vmatprep.subr.mxu0 0.0
        %1717 = vmatpush1.msra.mxu0 0.0
        %1718 = vmatprep.subr.mxu0 0.0
        %1719 = vmatpush1.msra.mxu0 0.0
        %1720 = vmatprep.subr.mxu0 0.0
        %1721 = vmatpush1.msra.mxu0 0.0
        %1722 = vmatprep.subr.mxu0 0.0
        %1723 = vmatpush1.msra.mxu0 0.0
        %1724 = vmatprep.subr.mxu0 0.0
        %1725 = vmatpush1.msra.mxu0 0.0
        %1726 = vmatprep.subr.mxu0 0.0
        %1727 = vmatpush1.msra.mxu0 0.0
        %1728 = vmatprep.subr.mxu0 0.0
        %1729 = vmatpush1.msra.mxu0 0.0
        %1730 = vmatprep.subr.mxu0 0.0
        %1731 = vmatpush1.msra.mxu0 0.0
        %1732 = vmatprep.subr.mxu0 0.0
        %1733 = vmatpush1.msra.mxu0 0.0
        %1734 = vmatprep.subr.mxu0 0.0
        %1735 = vmatpush1.msra.mxu0 0.0
        %1736 = vmatprep.subr.mxu0 0.0
        %1737 = vmatpush1.msra.mxu0 0.0
        %1738 = vmatprep.subr.mxu0 0.0
        %1739 = vmatpush1.msra.mxu0 0.0
        %1740 = vmatprep.subr.mxu0 0.0
        %1741 = vmatpush1.msra.mxu0 0.0
        %1742 = vmatprep.subr.mxu0 0.0
        %1743 = vmatpush1.msra.mxu0 0.0
        %1744 = vmatprep.subr.mxu0 0.0
        %1745 = vmatpush1.msra.mxu0 0.0
        %1746 = vmatprep.subr.mxu0 0.0
        %1747 = vmatpush1.msra.mxu0 0.0
        %1748 = vmatprep.subr.mxu0 0.0
        %1749 = vmatpush1.msra.mxu0 0.0
        %1750 = vmatprep.subr.mxu0 0.0
        %1751 = vmatpush1.msra.mxu0 0.0
        %1752 = vmatprep.subr.mxu0 0.0
        %1753 = vmatpush1.msra.mxu0 0.0
        %1754 = vmatprep.subr.mxu0 0.0
        %1755 = vmatpush1.msra.mxu0 0.0
        %1756 = vmatprep.subr.mxu0 0.0
        %1757 = vmatpush1.msra.mxu0 0.0
        %1758 = vmatprep.subr.mxu0 0.0
        %1759 = vmatpush1.msra.mxu0 0.0
        %1760 = vmatprep.subr.mxu0 0.0
        %1761 = vmatpush1.msra.mxu0 0.0
        %1762 = vmatprep.subr.mxu0 0.0
        %1763 = vmatpush1.msra.mxu0 0.0
        %1764 = vmatprep.mubr.f32.mxu0 0.0
        %1765 = vmatmul.mubr.f32.gmra.mrb[0].mxu0 %v1698
        %v1766 = vpop.f32.mrb[0].mxu0
        %v1767 = vadd.f32 0.0, %v1766
        %v1768 = vpop.f32.mrb[0].mxu0
        %1769 = vdwg.mxu0
        %v1771 = vsel %vm629, %v1330, 0
        %1773 = vmatprep.subr.mxu0 0.0
        %1774 = vmatpush1.msra.mxu0 %v622
        %1775 = vmatprep.subr.mxu0 0.0
        %1776 = vmatpush1.msra.mxu0 0.0
        %1777 = vmatprep.subr.mxu0 0.0
        %1778 = vmatpush1.msra.mxu0 0.0
        %1779 = vmatprep.subr.mxu0 0.0
        %1780 = vmatpush1.msra.mxu0 0.0
        %1781 = vmatprep.subr.mxu0 0.0
        %1782 = vmatpush1.msra.mxu0 0.0
        %1783 = vmatprep.subr.mxu0 0.0
        %1784 = vmatpush1.msra.mxu0 0.0
        %1785 = vmatprep.subr.mxu0 0.0
        %1786 = vmatpush1.msra.mxu0 0.0
        %1787 = vmatprep.subr.mxu0 0.0
        %1788 = vmatpush1.msra.mxu0 0.0
        %1789 = vmatprep.subr.mxu0 0.0
        %1790 = vmatpush1.msra.mxu0 0.0
        %1791 = vmatprep.subr.mxu0 0.0
        %1792 = vmatpush1.msra.mxu0 0.0
        %1793 = vmatprep.subr.mxu0 0.0
        %1794 = vmatpush1.msra.mxu0 0.0
        %1795 = vmatprep.subr.mxu0 0.0
        %1796 = vmatpush1.msra.mxu0 0.0
        %1797 = vmatprep.subr.mxu0 0.0
        %1798 = vmatpush1.msra.mxu0 0.0
        %1799 = vmatprep.subr.mxu0 0.0
        %1800 = vmatpush1.msra.mxu0 0.0
        %1801 = vmatprep.subr.mxu0 0.0
        %1802 = vmatpush1.msra.mxu0 0.0
        %1803 = vmatprep.subr.mxu0 0.0
        %1804 = vmatpush1.msra.mxu0 0.0
        %1805 = vmatprep.subr.mxu0 0.0
        %1806 = vmatpush1.msra.mxu0 0.0
        %1807 = vmatprep.subr.mxu0 0.0
        %1808 = vmatpush1.msra.mxu0 0.0
        %1809 = vmatprep.subr.mxu0 0.0
        %1810 = vmatpush1.msra.mxu0 0.0
        %1811 = vmatprep.subr.mxu0 0.0
        %1812 = vmatpush1.msra.mxu0 0.0
        %1813 = vmatprep.subr.mxu0 0.0
        %1814 = vmatpush1.msra.mxu0 0.0
        %1815 = vmatprep.subr.mxu0 0.0
        %1816 = vmatpush1.msra.mxu0 0.0
        %1817 = vmatprep.subr.mxu0 0.0
        %1818 = vmatpush1.msra.mxu0 0.0
        %1819 = vmatprep.subr.mxu0 0.0
        %1820 = vmatpush1.msra.mxu0 0.0
        %1821 = vmatprep.subr.mxu0 0.0
        %1822 = vmatpush1.msra.mxu0 0.0
        %1823 = vmatprep.subr.mxu0 0.0
        %1824 = vmatpush1.msra.mxu0 0.0
        %1825 = vmatprep.subr.mxu0 0.0
        %1826 = vmatpush1.msra.mxu0 0.0
        %1827 = vmatprep.subr.mxu0 0.0
        %1828 = vmatpush1.msra.mxu0 0.0
        %1829 = vmatprep.subr.mxu0 0.0
        %1830 = vmatpush1.msra.mxu0 0.0
        %1831 = vmatprep.subr.mxu0 0.0
        %1832 = vmatpush1.msra.mxu0 0.0
        %1833 = vmatprep.subr.mxu0 0.0
        %1834 = vmatpush1.msra.mxu0 0.0
        %1835 = vmatprep.subr.mxu0 0.0
        %1836 = vmatpush1.msra.mxu0 0.0
        %1837 = vmatprep.mubr.f32.mxu0 0.0
        %1838 = vmatmul.mubr.f32.gmra.mrb[0].mxu0 %v1771
        %v1839 = vpop.f32.mrb[0].mxu0
        %v1840 = vadd.f32 0.0, %v1839
        %v1841 = vpop.f32.mrb[0].mxu0
        %1842 = vdwg.mxu0
        %v1844 = vsel %vm629, %v1331, 0
        %1846 = vmatprep.subr.mxu0 0.0
        %1847 = vmatpush1.msra.mxu0 %v625
        %1848 = vmatprep.subr.mxu0 0.0
        %1849 = vmatpush1.msra.mxu0 0.0
        %1850 = vmatprep.subr.mxu0 0.0
        %1851 = vmatpush1.msra.mxu0 0.0
        %1852 = vmatprep.subr.mxu0 0.0
        %1853 = vmatpush1.msra.mxu0 0.0
        %1854 = vmatprep.subr.mxu0 0.0
        %1855 = vmatpush1.msra.mxu0 0.0
        %1856 = vmatprep.subr.mxu0 0.0
        %1857 = vmatpush1.msra.mxu0 0.0
        %1858 = vmatprep.subr.mxu0 0.0
        %1859 = vmatpush1.msra.mxu0 0.0
        %1860 = vmatprep.subr.mxu0 0.0
        %1861 = vmatpush1.msra.mxu0 0.0
        %1862 = vmatprep.subr.mxu0 0.0
        %1863 = vmatpush1.msra.mxu0 0.0
        %1864 = vmatprep.subr.mxu0 0.0
        %1865 = vmatpush1.msra.mxu0 0.0
        %1866 = vmatprep.subr.mxu0 0.0
        %1867 = vmatpush1.msra.mxu0 0.0
        %1868 = vmatprep.subr.mxu0 0.0
        %1869 = vmatpush1.msra.mxu0 0.0
        %1870 = vmatprep.subr.mxu0 0.0
        %1871 = vmatpush1.msra.mxu0 0.0
        %1872 = vmatprep.subr.mxu0 0.0
        %1873 = vmatpush1.msra.mxu0 0.0
        %1874 = vmatprep.subr.mxu0 0.0
        %1875 = vmatpush1.msra.mxu0 0.0
        %1876 = vmatprep.subr.mxu0 0.0
        %1877 = vmatpush1.msra.mxu0 0.0
        %1878 = vmatprep.subr.mxu0 0.0
        %1879 = vmatpush1.msra.mxu0 0.0
        %1880 = vmatprep.subr.mxu0 0.0
        %1881 = vmatpush1.msra.mxu0 0.0
        %1882 = vmatprep.subr.mxu0 0.0
        %1883 = vmatpush1.msra.mxu0 0.0
        %1884 = vmatprep.subr.mxu0 0.0
        %1885 = vmatpush1.msra.mxu0 0.0
        %1886 = vmatprep.subr.mxu0 0.0
        %1887 = vmatpush1.msra.mxu0 0.0
        %1888 = vmatprep.subr.mxu0 0.0
        %1889 = vmatpush1.msra.mxu0 0.0
        %1890 = vmatprep.subr.mxu0 0.0
        %1891 = vmatpush1.msra.mxu0 0.0
        %1892 = vmatprep.subr.mxu0 0.0
        %1893 = vmatpush1.msra.mxu0 0.0
        %1894 = vmatprep.subr.mxu0 0.0
        %1895 = vmatpush1.msra.mxu0 0.0
        %1896 = vmatprep.subr.mxu0 0.0
        %1897 = vmatpush1.msra.mxu0 0.0
        %1898 = vmatprep.subr.mxu0 0.0
        %1899 = vmatpush1.msra.mxu0 0.0
        %1900 = vmatprep.subr.mxu0 0.0
        %1901 = vmatpush1.msra.mxu0 0.0
        %1902 = vmatprep.subr.mxu0 0.0
        %1903 = vmatpush1.msra.mxu0 0.0
        %1904 = vmatprep.subr.mxu0 0.0
        %1905 = vmatpush1.msra.mxu0 0.0
        %1906 = vmatprep.subr.mxu0 0.0
        %1907 = vmatpush1.msra.mxu0 0.0
        %1908 = vmatprep.subr.mxu0 0.0
        %1909 = vmatpush1.msra.mxu0 0.0
        %1910 = vmatprep.mubr.f32.mxu0 0.0
        %1911 = vmatmul.mubr.f32.gmra.mrb[0].mxu0 %v1844
        %v1912 = vpop.f32.mrb[0].mxu0
        %v1913 = vadd.f32 0.0, %v1912
        %v1914 = vpop.f32.mrb[0].mxu0
        %1915 = vdwg.mxu0
        %1917 = vrot.lane.b32.xlu0 %v1475, 8
        %v1918 = vpop.permute.xlu0 %1917
        %1921 = vrot.lane.b32.xlu0 %v1548, 16
        %v1922 = vpop.permute.xlu0 %1921
        %1925 = vrot.lane.b32.xlu0 %v1621, 24
        %v1926 = vpop.permute.xlu0 %1925
        %1929 = vrot.lane.b32.xlu0 %v1694, 32
        %v1930 = vpop.permute.xlu0 %1929
        %1933 = vrot.lane.b32.xlu0 %v1767, 40
        %v1934 = vpop.permute.xlu0 %1933
        %1937 = vrot.lane.b32.xlu0 %v1840, 48
        %v1938 = vpop.permute.xlu0 %1937
        %1941 = vrot.lane.b32.xlu0 %v1913, 56
        %v1942 = vpop.permute.xlu0 %1941
        %v1944 = vsel %vm629, %v1402, %v1918
        %vm1945 = vcmask 130048
        %v1946 = vsel %vm1945, %v1944, %v1922
        %vm1947 = vcmask 195584
        %v1948 = vsel %vm1947, %v1946, %v1926
        %vm1949 = vcmask 261120
        %v1950 = vsel %vm1949, %v1948, %v1930
        %vm1951 = vcmask 326656
        %v1952 = vsel %vm1951, %v1950, %v1934
        %vm1953 = vcmask 392192
        %v1954 = vsel %vm1953, %v1952, %v1938
        %vm1955 = vcmask 457728
        %v1956 = vsel %vm1955, %v1954, %v1942
        %v1957 = vld [vmem:[%s3] sm:$0xff]
        %v1958 = vld [vmem:[%s3 + $0x8] sm:$0xff]
        %v1959 = vld [vmem:[%s3 + $0x10] sm:$0xff]
        %v1960 = vld [vmem:[%s3 + $0x18] sm:$0xff]
        %v1961 = vld [vmem:[%s3 + $0x20] sm:$0xff]
        %v1962 = vld [vmem:[%s3 + $0x28] sm:$0xff]
        %v1963 = vld [vmem:[%s3 + $0x30] sm:$0xff]
        %v1964 = vld [vmem:[%s3 + $0x38] sm:$0xff]
        %v1965 = vld [vmem:[%s4] sm:$0x1]
        %v1967 = vlaneseq
        %v1968 = vshrl.u32 %v1967, 7
        %v1969 = vsub.s32 0, %v1968
        %v1970 = vrot.slane %v1965, %v1969
        %v1973 = vsel %vm500, %v1956, 0
        %1975 = vmatprep.subr.mxu0 0.0
        %1976 = vmatpush1.msra.mxu0 %v1957
        %1977 = vmatprep.subr.mxu0 0.0
        %1978 = vmatpush1.msra.mxu0 %v1958
        %1979 = vmatprep.subr.mxu0 0.0
        %1980 = vmatpush1.msra.mxu0 %v1959
        %1981 = vmatprep.subr.mxu0 0.0
        %1982 = vmatpush1.msra.mxu0 %v1960
        %1983 = vmatprep.subr.mxu0 0.0
        %1984 = vmatpush1.msra.mxu0 %v1961
        %1985 = vmatprep.subr.mxu0 0.0
        %1986 = vmatpush1.msra.mxu0 %v1962
        %1987 = vmatprep.subr.mxu0 0.0
        %1988 = vmatpush1.msra.mxu0 %v1963
        %1989 = vmatprep.subr.mxu0 0.0
        %1990 = vmatpush1.msra.mxu0 %v1964
        %1991 = vmatprep.subr.mxu0 0.0
        %1992 = vmatpush1.msra.mxu0 0.0
        %1993 = vmatprep.subr.mxu0 0.0
        %1994 = vmatpush1.msra.mxu0 0.0
        %1995 = vmatprep.subr.mxu0 0.0
        %1996 = vmatpush1.msra.mxu0 0.0
        %1997 = vmatprep.subr.mxu0 0.0
        %1998 = vmatpush1.msra.mxu0 0.0
        %1999 = vmatprep.subr.mxu0 0.0
        %2000 = vmatpush1.msra.mxu0 0.0
        %2001 = vmatprep.subr.mxu0 0.0
        %2002 = vmatpush1.msra.mxu0 0.0
        %2003 = vmatprep.subr.mxu0 0.0
        %2004 = vmatpush1.msra.mxu0 0.0
        %2005 = vmatprep.subr.mxu0 0.0
        %2006 = vmatpush1.msra.mxu0 0.0
        %2007 = vmatprep.subr.mxu0 0.0
        %2008 = vmatpush1.msra.mxu0 0.0
        %2009 = vmatprep.subr.mxu0 0.0
        %2010 = vmatpush1.msra.mxu0 0.0
        %2011 = vmatprep.subr.mxu0 0.0
        %2012 = vmatpush1.msra.mxu0 0.0
        %2013 = vmatprep.subr.mxu0 0.0
        %2014 = vmatpush1.msra.mxu0 0.0
        %2015 = vmatprep.subr.mxu0 0.0
        %2016 = vmatpush1.msra.mxu0 0.0
        %2017 = vmatprep.subr.mxu0 0.0
        %2018 = vmatpush1.msra.mxu0 0.0
        %2019 = vmatprep.subr.mxu0 0.0
        %2020 = vmatpush1.msra.mxu0 0.0
        %2021 = vmatprep.subr.mxu0 0.0
        %2022 = vmatpush1.msra.mxu0 0.0
        %2023 = vmatprep.subr.mxu0 0.0
        %2024 = vmatpush1.msra.mxu0 0.0
        %2025 = vmatprep.subr.mxu0 0.0
        %2026 = vmatpush1.msra.mxu0 0.0
        %2027 = vmatprep.subr.mxu0 0.0
        %2028 = vmatpush1.msra.mxu0 0.0
        %2029 = vmatprep.subr.mxu0 0.0
        %2030 = vmatpush1.msra.mxu0 0.0
        %2031 = vmatprep.subr.mxu0 0.0
        %2032 = vmatpush1.msra.mxu0 0.0
        %2033 = vmatprep.subr.mxu0 0.0
        %2034 = vmatpush1.msra.mxu0 0.0
        %2035 = vmatprep.subr.mxu0 0.0
        %2036 = vmatpush1.msra.mxu0 0.0
        %2037 = vmatprep.subr.mxu0 0.0
        %2038 = vmatpush1.msra.mxu0 0.0
        %2039 = vmatprep.mubr.f32.mxu0 0.0
        %2040 = vmatmul.mubr.f32.gmra.mrb[0].mxu0 %v1973
        %v2041 = vpop.f32.mrb[0].mxu0
        %v2042 = vadd.f32 %v1970, %v2041
        %v2043 = vpop.f32.mrb[0].mxu0
        %2044 = vdwg.mxu0
        %v2045 = vadd.f32 %v471, %v2042
        %v2046 = vld [vmem:[%s9] sm:$0x1]
        %v2047 = vld [vmem:[%s10] sm:$0x1]
        %v2048 = vsel %vm500, %v2045, 0.0
        %2049 = vadd.xlane.f32.xlu0 %v2048
        %v2050 = vpop.xlane.xlu0 %2049
        %v2051 = vrcp.pop 64.0
        %v2052 = vmul.f32 %v2050, %v2051
        %v2053 = vsub.f32 %v2045, %v2052
        %v2054 = vmul.f32 %v2053, %v2053
        %v2055 = vsel %vm500, %v2054, 0.0
        %2056 = vadd.xlane.f32.xlu0 %v2055
        %v2057 = vpop.xlane.xlu0 %2056
        %v2058 = vmul.f32 %v2057, %v2051
        %v2059 = vadd.f32 %v2058, 1e-05
        %v2060 = vrsqrt.pop %v2059
        %v2061 = vmul.f32 %v2053, %v2060
        %v2063 = vlaneseq
        %v2064 = vshrl.u32 %v2063, 7
        %v2065 = vsub.s32 0, %v2064
        %v2066 = vrot.slane %v2046, %v2065
        %v2068 = vmul.f32 %v2061, %v2066
        %v2070 = vlaneseq
        %v2071 = vshrl.u32 %v2070, 7
        %v2072 = vsub.s32 0, %v2071
        %v2073 = vrot.slane %v2047, %v2072
        %v2075 = vadd.f32 %v2068, %v2073
        %v2076 = vld [vmem:[#allocation5] sm:$0xff]
        %v2077 = vld [vmem:[#allocation5 + $0x8] sm:$0xff]
        %v2078 = vld [vmem:[#allocation5 + $0x10] sm:$0xff]
        %v2079 = vld [vmem:[#allocation5 + $0x18] sm:$0xff]
        %v2080 = vld [vmem:[#allocation5 + $0x20] sm:$0xff]
        %v2081 = vld [vmem:[#allocation5 + $0x28] sm:$0xff]
        %v2082 = vld [vmem:[#allocation5 + $0x30] sm:$0xff]
        %v2083 = vld [vmem:[#allocation5 + $0x38] sm:$0xff]
        %v2084 = vld [vmem:[%s6] sm:$0x1]
        %v2086 = vlaneseq
        %v2087 = vshrl.u32 %v2086, 7
        %v2088 = vsub.s32 0, %v2087
        %v2089 = vrot.slane %v2084, %v2088
        %v2092 = vsel %vm500, %v2075, 0
        %2094 = vmatprep.subr.mxu0 0.0
        %2095 = vmatpush1.msra.mxu0 %v2076
        %2096 = vmatprep.subr.mxu0 0.0
        %2097 = vmatpush1.msra.mxu0 %v2077
        %2098 = vmatprep.subr.mxu0 0.0
        %2099 = vmatpush1.msra.mxu0 %v2078
        %2100 = vmatprep.subr.mxu0 0.0
        %2101 = vmatpush1.msra.mxu0 %v2079
        %2102 = vmatprep.subr.mxu0 0.0
        %2103 = vmatpush1.msra.mxu0 %v2080
        %2104 = vmatprep.subr.mxu0 0.0
        %2105 = vmatpush1.msra.mxu0 %v2081
        %2106 = vmatprep.subr.mxu0 0.0
        %2107 = vmatpush1.msra.mxu0 %v2082
        %2108 = vmatprep.subr.mxu0 0.0
        %2109 = vmatpush1.msra.mxu0 %v2083
        %2110 = vmatprep.subr.mxu0 0.0
        %2111 = vmatpush1.msra.mxu0 0.0
        %2112 = vmatprep.subr.mxu0 0.0
        %2113 = vmatpush1.msra.mxu0 0.0
        %2114 = vmatprep.subr.mxu0 0.0
        %2115 = vmatpush1.msra.mxu0 0.0
        %2116 = vmatprep.subr.mxu0 0.0
        %2117 = vmatpush1.msra.mxu0 0.0
        %2118 = vmatprep.subr.mxu0 0.0
        %2119 = vmatpush1.msra.mxu0 0.0
        %2120 = vmatprep.subr.mxu0 0.0
        %2121 = vmatpush1.msra.mxu0 0.0
        %2122 = vmatprep.subr.mxu0 0.0
        %2123 = vmatpush1.msra.mxu0 0.0
        %2124 = vmatprep.subr.mxu0 0.0
        %2125 = vmatpush1.msra.mxu0 0.0
        %2126 = vmatprep.subr.mxu0 0.0
        %2127 = vmatpush1.msra.mxu0 0.0
        %2128 = vmatprep.subr.mxu0 0.0
        %2129 = vmatpush1.msra.mxu0 0.0
        %2130 = vmatprep.subr.mxu0 0.0
        %2131 = vmatpush1.msra.mxu0 0.0
        %2132 = vmatprep.subr.mxu0 0.0
        %2133 = vmatpush1.msra.mxu0 0.0
        %2134 = vmatprep.subr.mxu0 0.0
        %2135 = vmatpush1.msra.mxu0 0.0
        %2136 = vmatprep.subr.mxu0 0.0
        %2137 = vmatpush1.msra.mxu0 0.0
        %2138 = vmatprep.subr.mxu0 0.0
        %2139 = vmatpush1.msra.mxu0 0.0
        %2140 = vmatprep.subr.mxu0 0.0
        %2141 = vmatpush1.msra.mxu0 0.0
        %2142 = vmatprep.subr.mxu0 0.0
        %2143 = vmatpush1.msra.mxu0 0.0
        %2144 = vmatprep.subr.mxu0 0.0
        %2145 = vmatpush1.msra.mxu0 0.0
        %2146 = vmatprep.subr.mxu0 0.0
        %2147 = vmatpush1.msra.mxu0 0.0
        %2148 = vmatprep.subr.mxu0 0.0
        %2149 = vmatpush1.msra.mxu0 0.0
        %2150 = vmatprep.subr.mxu0 0.0
        %2151 = vmatpush1.msra.mxu0 0.0
        %2152 = vmatprep.subr.mxu0 0.0
        %2153 = vmatpush1.msra.mxu0 0.0
        %2154 = vmatprep.subr.mxu0 0.0
        %2155 = vmatpush1.msra.mxu0 0.0
        %2156 = vmatprep.subr.mxu0 0.0
        %2157 = vmatpush1.msra.mxu0 0.0
        %2158 = vmatprep.mubr.f32.mxu0 0.0
        %2159 = vmatmul.mubr.f32.gmra.mrb[0].mxu0 %v2092
        %v2160 = vpop.f32.mrb[0].mxu0
        %v2161 = vadd.f32 %v2089, %v2160
        %v2162 = vpop.f32.mrb[0].mxu0
        %2163 = vdwg.mxu0
        %v2164 = vmul.f32 %v2161, 0.5
        %v2165 = vmul.f32 %v2161, 0.70710677
        %v2166 = verf.f32.pop %v2165
        %v2167 = vadd.f32 %v2166, 1.0
        %v2168 = vmul.f32 %v2164, %v2167
        %v2169 = vld [vmem:[%s7] sm:$0xff]
        %v2170 = vld [vmem:[%s7 + $0x8] sm:$0xff]
        %v2171 = vld [vmem:[%s7 + $0x10] sm:$0xff]
        %v2172 = vld [vmem:[%s7 + $0x18] sm:$0xff]
        %v2173 = vld [vmem:[%s7 + $0x20] sm:$0xff]
        %v2174 = vld [vmem:[%s7 + $0x28] sm:$0xff]
        %v2175 = vld [vmem:[%s7 + $0x30] sm:$0xff]
        %v2176 = vld [vmem:[%s7 + $0x38] sm:$0xff]
        %v2177 = vld [vmem:[%s7 + $0x40] sm:$0xff]
        %v2178 = vld [vmem:[%s7 + $0x48] sm:$0xff]
        %v2179 = vld [vmem:[%s7 + $0x50] sm:$0xff]
        %v2180 = vld [vmem:[%s7 + $0x58] sm:$0xff]
        %v2181 = vld [vmem:[%s7 + $0x60] sm:$0xff]
        %v2182 = vld [vmem:[%s7 + $0x68] sm:$0xff]
        %v2183 = vld [vmem:[%s7 + $0x70] sm:$0xff]
        %v2184 = vld [vmem:[%s7 + $0x78] sm:$0xff]
        %v2185 = vld [vmem:[%s8] sm:$0x1]
        %v2187 = vlaneseq
        %v2188 = vshrl.u32 %v2187, 7
        %v2189 = vsub.s32 0, %v2188
        %v2190 = vrot.slane %v2185, %v2189
        %2192 = vmatprep.subr.mxu0 0.0
        %2193 = vmatpush1.msra.mxu0 %v2169
        %2194 = vmatprep.subr.mxu0 0.0
        %2195 = vmatpush1.msra.mxu0 %v2170
        %2196 = vmatprep.subr.mxu0 0.0
        %2197 = vmatpush1.msra.mxu0 %v2171
        %2198 = vmatprep.subr.mxu0 0.0
        %2199 = vmatpush1.msra.mxu0 %v2172
        %2200 = vmatprep.subr.mxu0 0.0
        %2201 = vmatpush1.msra.mxu0 %v2173
        %2202 = vmatprep.subr.mxu0 0.0
        %2203 = vmatpush1.msra.mxu0 %v2174
        %2204 = vmatprep.subr.mxu0 0.0
        %2205 = vmatpush1.msra.mxu0 %v2175
        %2206 = vmatprep.subr.mxu0 0.0
        %2207 = vmatpush1.msra.mxu0 %v2176
        %2208 = vmatprep.subr.mxu0 0.0
        %2209 = vmatpush1.msra.mxu0 %v2177
        %2210 = vmatprep.subr.mxu0 0.0
        %2211 = vmatpush1.msra.mxu0 %v2178
        %2212 = vmatprep.subr.mxu0 0.0
        %2213 = vmatpush1.msra.mxu0 %v2179
        %2214 = vmatprep.subr.mxu0 0.0
        %2215 = vmatpush1.msra.mxu0 %v2180
        %2216 = vmatprep.subr.mxu0 0.0
        %2217 = vmatpush1.msra.mxu0 %v2181
        %2218 = vmatprep.subr.mxu0 0.0
        %2219 = vmatpush1.msra.mxu0 %v2182
        %2220 = vmatprep.subr.mxu0 0.0
        %2221 = vmatpush1.msra.mxu0 %v2183
        %2222 = vmatprep.subr.mxu0 0.0
        %2223 = vmatpush1.msra.mxu0 %v2184
        %2224 = vmatprep.subr.mxu0 0.0
        %2225 = vmatpush1.msra.mxu0 0.0
        %2226 = vmatprep.subr.mxu0 0.0
        %2227 = vmatpush1.msra.mxu0 0.0
        %2228 = vmatprep.subr.mxu0 0.0
        %2229 = vmatpush1.msra.mxu0 0.0
        %2230 = vmatprep.subr.mxu0 0.0
        %2231 = vmatpush1.msra.mxu0 0.0
        %2232 = vmatprep.subr.mxu0 0.0
        %2233 = vmatpush1.msra.mxu0 0.0
        %2234 = vmatprep.subr.mxu0 0.0
        %2235 = vmatpush1.msra.mxu0 0.0
        %2236 = vmatprep.subr.mxu0 0.0
        %2237 = vmatpush1.msra.mxu0 0.0
        %2238 = vmatprep.subr.mxu0 0.0
        %2239 = vmatpush1.msra.mxu0 0.0
        %2240 = vmatprep.subr.mxu0 0.0
        %2241 = vmatpush1.msra.mxu0 0.0
        %2242 = vmatprep.subr.mxu0 0.0
        %2243 = vmatpush1.msra.mxu0 0.0
        %2244 = vmatprep.subr.mxu0 0.0
        %2245 = vmatpush1.msra.mxu0 0.0
        %2246 = vmatprep.subr.mxu0 0.0
        %2247 = vmatpush1.msra.mxu0 0.0
        %2248 = vmatprep.subr.mxu0 0.0
        %2249 = vmatpush1.msra.mxu0 0.0
        %2250 = vmatprep.subr.mxu0 0.0
        %2251 = vmatpush1.msra.mxu0 0.0
        %2252 = vmatprep.subr.mxu0 0.0
        %2253 = vmatpush1.msra.mxu0 0.0
        %2254 = vmatprep.subr.mxu0 0.0
        %2255 = vmatpush1.msra.mxu0 0.0
        %2256 = vmatprep.mubr.f32.mxu0 0.0
        %2257 = vmatmul.mubr.f32.gmra.mrb[0].mxu0 %v2168
        %v2258 = vpop.f32.mrb[0].mxu0
        %v2259 = vadd.f32 %v2190, %v2258
        %v2260 = vpop.f32.mrb[0].mxu0
        %2261 = vdwg.mxu0
        %v2262 = vadd.f32 %v2075, %v2259
        %v2263 = vld [vmem:[%s11] sm:$0x1]
        %v2264 = vld [vmem:[%s12] sm:$0x1]
        %v2265 = vsel %vm500, %v2262, 0.0
        %2266 = vadd.xlane.f32.xlu0 %v2265
        %v2267 = vpop.xlane.xlu0 %2266
        %v2268 = vmul.f32 %v2267, %v2051
        %v2269 = vsub.f32 %v2262, %v2268
        %v2270 = vmul.f32 %v2269, %v2269
        %v2271 = vsel %vm500, %v2270, 0.0
        %2272 = vadd.xlane.f32.xlu0 %v2271
        %v2273 = vpop.xlane.xlu0 %2272
        %v2274 = vmul.f32 %v2273, %v2051
        %v2275 = vadd.f32 %v2274, 1e-05
        %v2276 = vrsqrt.pop %v2275
        %v2277 = vmul.f32 %v2269, %v2276
        %v2279 = vlaneseq
        %v2280 = vshrl.u32 %v2279, 7
        %v2281 = vsub.s32 0, %v2280
        %v2282 = vrot.slane %v2263, %v2281
        %v2284 = vmul.f32 %v2277, %v2282
        %v2286 = vlaneseq
        %v2287 = vshrl.u32 %v2286, 7
        %v2288 = vsub.s32 0, %v2287
        %v2289 = vrot.slane %v2264, %v2288
        %v2291 = vadd.f32 %v2284, %v2289
        %2292 = vst.msk [vmem:[%s470] sm:$0xff] %vm500, %v2291
        %s2293 = sand.u32 %s317, 1
        %s2294 = scalar_lea.sflag [#allocation4], %s2293
        %s2295 = sand.u32 %s317, 1
        %s2296 = smul.addr %s2295, 8
        %s2297 = scalar_lea.vmem [#allocation7], %s2296
        // Predicated region
        $region81: #{tpu_custom_call.1} parent=71 // pred_check
          %p2298 = pneg %p327
        $region82: #{tpu_custom_call.1} parent=71 // pred_check_branch
          %2300 = sbr.rel (%p2298) target = $region84
        $region83: #{tpu_custom_call.1} parent=71 // pred_region
          %s2302 = ssub.s32 128, 128
          %2303 = vsyncadd %s2294, %s2302
          %s2304 = smul.addr %s31, 128
          %s2305 = scalar_lea.hbm %s13, %s2304
          %s2307 = sshll.u32 %s2297, 4
          %s2308 = int_to_ptr.vmem [resolvable:$true] %s2307
          %2310 = dma.vmem_to_hbm [thread:$0]  %s2308, 128, %s2305, %s2294
        $region84: #{tpu_custom_call.1} parent=71 // pred_fallthru
          _
      $region72: #{tpu_custom_call.1} parent=5 // pred_fallthru
        _
      %p2311 = scmp.le.s32.totalorder 2, %s26
      // Predicated region
      $region85: #{tpu_custom_call.1} parent=5 // pred_check
        %p2312 = pneg %p2311
      $region86: #{tpu_custom_call.1} parent=5 // pred_check_branch
        %2314 = sbr.rel (%p2312) target = $region88
      $region87: #{tpu_custom_call.1} parent=5 // pred_region
        %s2315 = ssub.s32 %s26, 2
        // Predicated region
        $region89: #{tpu_custom_call.1} parent=87 // pred_check
          %p2316 = pneg %p333
        $region90: #{tpu_custom_call.1} parent=87 // pred_check_branch
          %2318 = sbr.rel (%p2316) target = $region92
        $region91: #{tpu_custom_call.1} parent=87 // pred_region
          %s2319 = sand.u32 %s318, 1
          %s2320 = scalar_lea.sflag [#allocation4], %s2319
          %s2321 = sand.u32 %s318, 1
          %s2322 = smul.addr %s2321, 8
          %s2323 = scalar_lea.vmem [#allocation7], %s2322
          %2324 = dma.done %s2320, 128
        $region92: #{tpu_custom_call.1} parent=87 // pred_fallthru
          _
      $region88: #{tpu_custom_call.1} parent=5 // pred_fallthru
        _
    $region6: #{tpu_custom_call.1} parent=1 // loop_footer
      %s30 = sadd.s32 1, %s26
    $region7: #{tpu_custom_call.1} parent=1 // loop_footer_branch
      %25 = sbr.rel target = $region3
    $region8: #{tpu_custom_call.1} parent=1 // loop_exit
      _
    %2325 = vsyncpa [#allocation3], 1
    %s2326 = scalar_lea.sflag [#allocation3], 1
    %2327 = vsyncpa %s2326, 1
    %2328 = vsyncpa [#allocation6], 1
    %2329 = vsyncpa [#allocation4], 1
    %s2330 = scalar_lea.sflag [#allocation4], 1
    %2331 = vsyncpa %s2330, 1

</llo_original>
